<compile_context>
chip_gen: v7x
topology: tpu7x:2x2x1
jax: 0.10.0
libtpu: 0.0.40
codegen_flags: <defaults>
</compile_context>

<pallas_src>
import functools

import numpy as np
import jax
import jax.numpy as jnp
from jax import lax
from jax.experimental import pallas as pl
from jax.experimental.pallas import tpu as pltpu

BIT_F = 8
BIT_P_w = 8
RANGE_MAX = 0.96
RANGE_MIN = 0.96

_LANE = 128
_EPS = 1e-12
# MXU input dtype. Values are 8-bit-quantized already, so bf16 is near-lossless; set to
# jnp.float32 for bit-accuracy checks against the f32 PyTorch reference.
_MATMUL_DTYPE = jnp.bfloat16


def _round_up(x, m):
    return ((x + m - 1) // m) * m


def _vmem_limit_bytes(per_step_bytes):
    # Double-buffered pipeline + headroom for Mosaic internal scratch; clamp so the request
    # stays safely under every generation's physical VMEM (v7x: 64 MiB per TensorCore).
    need = 2 * per_step_bytes + (4 << 20)
    return int(min(max(need, 8 << 20), 48 << 20))


# ---------------- Pallas kernels (hot path) -----------------------------------------------------
# TODO(synk): add a K grid axis ('arbitrary', reduction-last) with a VMEM accumulator if this
# kernel is reused for layers with large C_in*k*k; at K=36 a single K block is optimal.


def _gemm_stats_kernel(a_ref, w_ref, b_ref, pmax_ref, pmin_ref, *, tm, m_total):
    """Pass 1: one (tm, Np) tile of A @ W + bias, emitting only fused per-channel min/max."""
    acc = jnp.dot(a_ref[...], w_ref[...], preferred_element_type=jnp.float32)
    y = acc + b_ref[...]
    # Mask M-padding rows so they don't pollute the output-range statistics.
    row = lax.broadcasted_iota(jnp.int32, (tm, 1), 0) + pl.program_id(0) * tm
    valid = row < m_total
    np_ = y.shape[1]
    tile_max = jnp.max(jnp.where(valid, y, -jnp.inf), axis=0, keepdims=True)
    tile_min = jnp.min(jnp.where(valid, y, jnp.inf), axis=0, keepdims=True)
    pmax_ref[...] = jnp.broadcast_to(tile_max, (8, np_))
    pmin_ref[...] = jnp.broadcast_to(tile_min, (8, np_))


def _gemm_quant_kernel(a_ref, w_ref, p_ref, o_ref):
    """Pass 2: recompute the same tile of A @ W + bias and apply fix_output per channel.

    p_ref rows: 0=bias, 1=cmin, 2=cmax, 3=scale, 4=1/scale (padded lanes are all zero).
    """
    acc = jnp.dot(a_ref[...], w_ref[...], preferred_element_type=jnp.float32)
    bias = p_ref[0:1, :]
    cmin = p_ref[1:2, :]
    cmax = p_ref[2:3, :]
    scale = p_ref[3:4, :]
    inv = p_ref[4:5, :]
    y = acc + bias
    yc = jnp.clip(y, cmin, cmax)
    o_ref[...] = jnp.round((yc - cmin) * inv) * scale + cmin


def conv_stats_pallas(a_p, w_t, bias_row, m_total, tm):
    Mp, K = a_p.shape
    Np = w_t.shape[1]
    grid_m = Mp // tm
    kern = functools.partial(_gemm_stats_kernel, tm=tm, m_total=m_total)
    itm_a = a_p.dtype.itemsize
    itm_w = w_t.dtype.itemsize
    per_step = tm * K * itm_a + K * Np * itm_w + Np * 4 + 2 * 8 * Np * 4
    cost = pl.CostEstimate(
        flops=2 * Mp * K * Np,
        transcendentals=0,
        bytes_accessed=Mp * K * itm_a + K * Np * itm_w + Np * 4 + 2 * grid_m * 8 * Np * 4,
    )
    pmax, pmin = pl.pallas_call(
        kern,
        grid=(grid_m,),
        in_specs=[
            pl.BlockSpec((tm, K), lambda i: (i, 0)),   # full-K block (== array extent)
            pl.BlockSpec((K, Np), lambda i: (0, 0)),
            pl.BlockSpec((1, Np), lambda i: (0, 0)),
        ],
        out_specs=[
            pl.BlockSpec((8, Np), lambda i: (i, 0)),
            pl.BlockSpec((8, Np), lambda i: (i, 0)),
        ],
        out_shape=[
            jax.ShapeDtypeStruct((grid_m * 8, Np), jnp.float32),
            jax.ShapeDtypeStruct((grid_m * 8, Np), jnp.float32),
        ],
        compiler_params=pltpu.CompilerParams(
            dimension_semantics=("parallel",),
            vmem_limit_bytes=_vmem_limit_bytes(per_step),
        ),
        cost_estimate=cost,
    )(a_p, w_t, bias_row)
    return pmax, pmin


def conv_quant_pallas(a_p, w_t, params, tm):
    Mp, K = a_p.shape
    Np = w_t.shape[1]
    grid_m = Mp // tm
    itm_a = a_p.dtype.itemsize
    itm_w = w_t.dtype.itemsize
    per_step = tm * K * itm_a + K * Np * itm_w + 8 * Np * 4 + tm * Np * 4
    cost = pl.CostEstimate(
        flops=2 * Mp * K * Np + 6 * Mp * Np,
        transcendentals=0,
        bytes_accessed=Mp * K * itm_a + K * Np * itm_w + 8 * Np * 4 + Mp * Np * 4,
    )
    return pl.pallas_call(
        _gemm_quant_kernel,
        grid=(grid_m,),
        in_specs=[
            pl.BlockSpec((tm, K), lambda i: (i, 0)),
            pl.BlockSpec((K, Np), lambda i: (0, 0)),
            pl.BlockSpec((8, Np), lambda i: (0, 0)),   # packed per-channel params, one DMA
        ],
        out_specs=pl.BlockSpec((tm, Np), lambda i: (i, 0)),   # lane-dense (128) output stores
        out_shape=jax.ShapeDtypeStruct((Mp, Np), jnp.float32),
        compiler_params=pltpu.CompilerParams(
            dimension_semantics=("parallel",),
            vmem_limit_bytes=_vmem_limit_bytes(per_step),
        ),
        cost_estimate=cost,
    )(a_p, w_t, params)


# ---------------- jitted forward (no host syncs between the two pallas_calls) -------------------


def _xywh_mask(cout):
    # YOLO-style anchor layout: channels 0-3, 7-10, 14-17 are xywh, the rest "other".
    mask = np.zeros((cout,), bool)
    for base in (0, 7, 14):
        for c in range(base, min(base + 4, cout)):
            mask[c] = True
    return mask


@functools.partial(jax.jit, static_argnames=("stride", "padding", "is_first", "tm"))
def _fix_conv2d_forward(x, weight, bias, state, *, stride, padding, is_first, tm):
    B, _, H, W = x.shape
    Cout, _, k, _ = weight.shape
    levels_f = float(2 ** BIT_F - 1)
    levels_w = float(2 ** BIT_P_w - 1)
    alpha = 0.95

    # ---- get_scale(input, BIT_F)
    input_scale = (jnp.max(x) - jnp.min(x)) / levels_f

    # ---- fix_weight
    wmin = jnp.min(weight)
    wmax = jnp.max(weight)
    if is_first:
        wmin = wmin * RANGE_MIN
        wmax = wmax * RANGE_MAX
    w_scale = (wmax - wmin) / levels_w
    wq = jnp.clip(weight, wmin, wmax)
    wq = jnp.round((wq - wmin) / jnp.maximum(w_scale, _EPS)) * w_scale + wmin

    # ---- fix_bias (scale = input_scale * weight_scale); guard degenerate zero scale
    b_scale = input_scale * w_scale
    safe_b_scale = jnp.where(b_scale > 0, b_scale, 1.0)
    bq = jnp.round(bias / safe_b_scale) * b_scale

    # ---- im2col via XLA patch extraction (feature order = channel-major, spatial-minor,
    #      matching weight.reshape(Cout, Cin*k*k))
    patches = lax.conv_general_dilated_patches(
        x, filter_shape=(k, k), window_strides=(stride, stride),
        padding=((padding, padding), (padding, padding)),
        dimension_numbers=("NCHW", "OIHW", "NHWC"))
    _, Ho, Wo, K = patches.shape
    M = B * Ho * Wo

    # ---- pad: M to the tile, Cout to the lane width. K stays UNPADDED (full-extent blocks).
    Np = _round_up(Cout, _LANE)
    Mp = _round_up(M, tm)
    a_p = jnp.pad(patches.reshape(M, K), ((0, Mp - M), (0, 0))).astype(_MATMUL_DTYPE)
    w_t = jnp.pad(wq.reshape(Cout, K).T, ((0, 0), (0, Np - Cout))).astype(_MATMUL_DTYPE)
    bias_row = jnp.zeros((1, Np), jnp.float32).at[0, :Cout].set(bq)

    # ---- pass 1: conv-as-GEMM + fused per-channel min/max statistics (no y written to HBM)
    pmax, pmin = conv_stats_pallas(a_p, w_t, bias_row, M, tm)

    col_max = jnp.max(pmax[:, :Cout], axis=0)   # per-output-channel max over all rows
    col_min = jnp.min(pmin[:, :Cout], axis=0)
    new_max = jnp.max(col_max)
    new_min = jnp.min(col_min)

    # activation is None in this config (would be applied to y here otherwise)

    # ---- running (EMA) output range
    cur_max = state["cur_max_F"] + alpha * (new_max - state["cur_max_F"])
    cur_min = state["cur_min_F"] + alpha * (new_min - state["cur_min_F"])
    # (the PyTorch module prints cur_max_F/cur_min_F here; omitted to keep stdout clean)

    use_global = cur_min > -1.0

    # "last layer" (per-anchor) statistics, derived from the fused per-channel stats
    mask_np = _xywh_mask(Cout)
    if mask_np.any():
        xywh_max = jnp.max(col_max[mask_np])
        xywh_min = jnp.min(col_min[mask_np])
    else:
        xywh_max, xywh_min = new_max, new_min
    last_max = jnp.where(use_global, state["last_max_F"],
                         state["last_max_F"] + alpha * (xywh_max - state["last_max_F"]))
    last_min = jnp.where(use_global, state["last_min_F"],
                         state["last_min_F"] + alpha * (xywh_min - state["last_min_F"]))

    mask = jnp.asarray(mask_np)
    cmin_last = jnp.where(mask, last_min, -8.0)
    cmax_last = jnp.where(mask, last_max, 8.0)
    cmin_c = jnp.where(use_global, jnp.full((Cout,), cur_min), cmin_last)
    cmax_c = jnp.where(use_global, jnp.full((Cout,), cur_max), cmax_last)

    scale_F = jnp.where(use_global, (cur_max - cur_min) / levels_f, state["scale_F"])
    zero_F = jnp.where(use_global, cur_min, state["zero_F"])

    # ---- packed per-channel quant parameters: rows = bias, cmin, cmax, scale, 1/scale.
    #      Padded lanes stay all-zero -> padded output lanes come out exactly 0 (sliced off).
    rng_c = cmax_c - cmin_c
    scale_c = rng_c / levels_f
    inv_c = jnp.where(rng_c > 0, 1.0 / jnp.maximum(scale_c, _EPS), 0.0)
    params = jnp.zeros((8, Np), jnp.float32)
    params = params.at[0, :Cout].set(bq)
    params = params.at[1, :Cout].set(cmin_c)
    params = params.at[2, :Cout].set(cmax_c)
    params = params.at[3, :Cout].set(scale_c)
    params = params.at[4, :Cout].set(inv_c)

    # ---- pass 2: recompute the cheap GEMM and quantize in one kernel (no f32 y round-trip)
    yq_p = conv_quant_pallas(a_p, w_t, params, tm)

    # back to PyTorch NCHW layout (drop M / lane padding)
    # TODO(synk): the NHWC->NCHW relayout is still an XLA pass over the output; could be folded
    # into the quant kernel via an XLU transpose (biggest relative win on v5e).
    out = yq_p[:M, :Cout].reshape(B, Ho, Wo, Cout).transpose(0, 3, 1, 2)

    new_state = {
        "cur_max_F": cur_max, "cur_min_F": cur_min,
        "last_max_F": last_max, "last_min_F": last_min,
        "scale_F": scale_F, "zero_F": zero_F,
        "scale_P_w": w_scale, "zero_P_w": wmin,
        "scale_P_b": b_scale, "zero_P_b": jnp.float32(0.0),
    }
    return out, new_state


# ---------------- the module ---------------------------------------------------------------------


class FixConv2dBlock:
    def __init__(self, in_channels, out_channels, kernel_size, stride=1, padding=0,
                 bias=True, bn=False, activation=None, key=None):
        assert bias is not bn
        self.in_channels = in_channels
        self.out_channels = out_channels
        self.kernel_size = kernel_size
        self.stride = stride
        self.padding = padding
        self.activation = activation
        self.alpha = 0.95
        self.is_first = True
        # EMA / scale state kept as device scalars to avoid host syncs inside forward.
        self.state = {
            "cur_max_F": jnp.float32(0.0), "cur_min_F": jnp.float32(0.0),
            "last_max_F": jnp.float32(0.0), "last_min_F": jnp.float32(0.0),
            "scale_F": jnp.float32(0.0), "zero_F": jnp.float32(-100.0),
            "scale_P_w": jnp.float32(0.0), "zero_P_w": jnp.float32(-100.0),
            "scale_P_b": jnp.float32(0.0), "zero_P_b": jnp.float32(-100.0),
        }
        kw, kb = jax.random.split(key)
        # weight.data.normal_(); bias.data.uniform_(-0.1, 0.1)  -> deterministic JAX init
        self.weight = jax.random.normal(
            kw, (out_channels, in_channels, kernel_size, kernel_size), jnp.float32)
        self.bias = (jax.random.uniform(kb, (out_channels,), jnp.float32, -0.1, 0.1)
                     if bias else None)
        self.bn = None  # TODO(synk): BatchNorm fusion path not exercised (config uses bias=True, bn=False)

    def forward(self, x):
        B, _, H, W = x.shape
        k, s, p = self.kernel_size, self.stride, self.padding
        Ho = (H + 2 * p - k) // s + 1
        Wo = (W + 2 * p - k) // s + 1
        M = B * Ho * Wo
        # M-tile: cap 1024 (HBM-roofline-friendly) but always >= 2 grid steps so both of v7x's
        # TensorCores get work via the 'parallel' grid axis.
        tm = max(8, min(1024, _round_up((M + 1) // 2, 8)))

        out, self.state = _fix_conv2d_forward(
            x, self.weight, self.bias, self.state,
            stride=s, padding=p, is_first=self.is_first, tm=tm)

        # mirror the PyTorch module's scalar attributes (device scalars: no forced host sync)
        for name in ("cur_max_F", "cur_min_F", "last_max_F", "last_min_F",
                     "scale_F", "zero_F", "scale_P_w", "zero_P_w",
                     "scale_P_b", "zero_P_b"):
            setattr(self, name, self.state[name])
        self.is_first = False
        return out


if __name__ == "__main__":
    key = jax.random.PRNGKey(0)
    kx, kparams = jax.random.split(key)

    B, Cin, H, W = 2, 4, 16, 16
    Cout, ksize = 21, 3  # 21 channels so the "last layer" (per-anchor) branch is well-defined

    x = jax.random.normal(kx, (B, Cin, H, W), jnp.float32)

    block = FixConv2dBlock(Cin, Cout, ksize, stride=1, padding=1,
                           bias=True, bn=False, activation=None, key=kparams)
    out = block.forward(x)
    out = jax.block_until_ready(out)

    assert out.shape == (B, Cout, H, W), out.shape
    assert bool(jnp.all(jnp.isfinite(out)))
    print("KERNEL_OK")
</pallas_src>

<mosaic_0001>
module attributes {stable_mosaic.version = 11 : i64} {
  func.func @_gemm_stats_kernel(%arg0: i32, %arg1: memref<256x36xbf16, #tpu.memory_space<vmem>>, %arg2: memref<36x128xbf16, #tpu.memory_space<vmem>>, %arg3: memref<1x128xf32, #tpu.memory_space<vmem>>, %arg4: memref<8x128xf32, #tpu.memory_space<vmem>>, %arg5: memref<8x128xf32, #tpu.memory_space<vmem>>) attributes {dimension_semantics = [#tpu.dimension_semantics<parallel>], iteration_bounds = array<i64: 2>, scalar_prefetch = 0 : i64, scratch_operands = 0 : i64, tpu.core_type = #tpu.core_type<tc>, window_params = [{transform_indices = @transform_0, window_bounds = array<i64: 256, 36>}, {pipeline_mode = #tpu.pipeline_mode<synchronous>, transform_indices = @transform_1, window_bounds = array<i64: 36, 128>}, {pipeline_mode = #tpu.pipeline_mode<synchronous>, transform_indices = @transform_2, window_bounds = array<i64: 1, 128>}, {transform_indices = @transform_3, window_bounds = array<i64: 8, 128>}, {transform_indices = @transform_4, window_bounds = array<i64: 8, 128>}]} {
    %c0 = arith.constant 0 : index
    %c0_0 = arith.constant 0 : index
    %0 = vector.load %arg1[%c0, %c0_0] : memref<256x36xbf16, #tpu.memory_space<vmem>>, vector<256x36xbf16>
    %c0_1 = arith.constant 0 : index
    %c0_2 = arith.constant 0 : index
    %1 = vector.load %arg2[%c0_1, %c0_2] : memref<36x128xbf16, #tpu.memory_space<vmem>>, vector<36x128xbf16>
    %cst = arith.constant dense<0.000000e+00> : vector<256x128xf32>
    %2 = tpu.matmul %0, %1, %cst {dimension_numbers = #tpu.dot_dimension_numbers<[1], [0], [0], [1], [0, 0, 1, 1], [], []>} : vector<256x36xbf16>, vector<36x128xbf16>, vector<256x128xf32> -> vector<256x128xf32>
    %c0_3 = arith.constant 0 : index
    %c0_4 = arith.constant 0 : index
    %3 = vector.load %arg3[%c0_3, %c0_4] : memref<1x128xf32, #tpu.memory_space<vmem>>, vector<1x128xf32>
    %4 = vector.broadcast %3 : vector<1x128xf32> to vector<256x128xf32>
    %5 = arith.addf %2, %4 : vector<256x128xf32>
    %6 = tpu.iota {dimensions = array<i32: 0>} : vector<256x1xi32>
    %c256_i32 = arith.constant 256 : i32
    %7 = arith.muli %arg0, %c256_i32 : i32
    %8 = vector.broadcast %7 : i32 to vector<256x1xi32>
    %9 = arith.addi %6, %8 : vector<256x1xi32>
    %c512_i32 = arith.constant 512 : i32
    %10 = vector.broadcast %c512_i32 : i32 to vector<256x1xi32>
    %11 = arith.cmpi slt, %9, %10 : vector<256x1xi32>
    %cst_5 = arith.constant 0xFF800000 : f32
    %12 = vector.shape_cast %11 : vector<256x1xi1> to vector<256x1xi1>
    %13 = vector.broadcast %12 : vector<256x1xi1> to vector<256x128xi1>
    %14 = vector.broadcast %cst_5 : f32 to vector<256x128xf32>
    %15 = arith.select %13, %5, %14 : vector<256x128xi1>, vector<256x128xf32>
    %cst_6 = arith.constant dense<0xFF800000> : vector<128xf32>
    %16 = vector.multi_reduction <maximumf>, %15, %cst_6 [0] : vector<256x128xf32> to vector<128xf32>
    %17 = vector.shape_cast %16 : vector<128xf32> to vector<1x128xf32>
    %cst_7 = arith.constant 0x7F800000 : f32
    %18 = vector.shape_cast %11 : vector<256x1xi1> to vector<256x1xi1>
    %19 = vector.broadcast %18 : vector<256x1xi1> to vector<256x128xi1>
    %20 = vector.broadcast %cst_7 : f32 to vector<256x128xf32>
    %21 = arith.select %19, %5, %20 : vector<256x128xi1>, vector<256x128xf32>
    %cst_8 = arith.constant dense<0x7F800000> : vector<128xf32>
    %22 = vector.multi_reduction <minimumf>, %21, %cst_8 [0] : vector<256x128xf32> to vector<128xf32>
    %23 = vector.shape_cast %22 : vector<128xf32> to vector<1x128xf32>
    %24 = vector.shape_cast %17 : vector<1x128xf32> to vector<1x128xf32>
    %25 = vector.broadcast %24 : vector<1x128xf32> to vector<8x128xf32>
    %c0_9 = arith.constant 0 : index
    %c0_10 = arith.constant 0 : index
    %26 = vector.load %arg4[%c0_9, %c0_10] : memref<8x128xf32, #tpu.memory_space<vmem>>, vector<8x128xf32>
    tpu.vector_store %arg4[%c0_9, %c0_10], %25 {strides = array<i32>} : memref<8x128xf32, #tpu.memory_space<vmem>>, vector<8x128xf32>,
    %27 = vector.shape_cast %23 : vector<1x128xf32> to vector<1x128xf32>
    %28 = vector.broadcast %27 : vector<1x128xf32> to vector<8x128xf32>
    %c0_11 = arith.constant 0 : index
    %c0_12 = arith.constant 0 : index
    %29 = vector.load %arg5[%c0_11, %c0_12] : memref<8x128xf32, #tpu.memory_space<vmem>>, vector<8x128xf32>
    tpu.vector_store %arg5[%c0_11, %c0_12], %28 {strides = array<i32>} : memref<8x128xf32, #tpu.memory_space<vmem>>, vector<8x128xf32>,
    return
  }
  func.func @transform_0(%arg0: i32) -> (i32, i32) {
    %c0_i32 = arith.constant 0 : i32
    %c0_i32_0 = arith.constant 0 : i32
    return %arg0, %c0_i32 : i32, i32
  }
  func.func @transform_1(%arg0: i32) -> (i32, i32) {
    %c0_i32 = arith.constant 0 : i32
    %c0_i32_0 = arith.constant 0 : i32
    %c0_i32_1 = arith.constant 0 : i32
    return %c0_i32, %c0_i32_0 : i32, i32
  }
  func.func @transform_2(%arg0: i32) -> (i32, i32) {
    %c0_i32 = arith.constant 0 : i32
    %c0_i32_0 = arith.constant 0 : i32
    %c0_i32_1 = arith.constant 0 : i32
    return %c0_i32, %c0_i32_0 : i32, i32
  }
  func.func @transform_3(%arg0: i32) -> (i32, i32) {
    %c0_i32 = arith.constant 0 : i32
    %c0_i32_0 = arith.constant 0 : i32
    return %arg0, %c0_i32 : i32, i32
  }
  func.func @transform_4(%arg0: i32) -> (i32, i32) {
    %c0_i32 = arith.constant 0 : i32
    %c0_i32_0 = arith.constant 0 : i32
    return %arg0, %c0_i32 : i32, i32
  }
}

module attributes {stable_mosaic.version = 11 : i64} {
  func.func @_gemm_quant_kernel(%arg0: i32, %arg1: memref<256x36xbf16, #tpu.memory_space<vmem>>, %arg2: memref<36x128xbf16, #tpu.memory_space<vmem>>, %arg3: memref<8x128xf32, #tpu.memory_space<vmem>>, %arg4: memref<256x128xf32, #tpu.memory_space<vmem>>) attributes {dimension_semantics = [#tpu.dimension_semantics<parallel>], iteration_bounds = array<i64: 2>, scalar_prefetch = 0 : i64, scratch_operands = 0 : i64, tpu.core_type = #tpu.core_type<tc>, window_params = [{transform_indices = @transform_0, window_bounds = array<i64: 256, 36>}, {pipeline_mode = #tpu.pipeline_mode<synchronous>, transform_indices = @transform_1, window_bounds = array<i64: 36, 128>}, {pipeline_mode = #tpu.pipeline_mode<synchronous>, transform_indices = @transform_2, window_bounds = array<i64: 8, 128>}, {transform_indices = @transform_3, window_bounds = array<i64: 256, 128>}]} {
    %c0 = arith.constant 0 : index
    %c0_0 = arith.constant 0 : index
    %0 = vector.load %arg1[%c0, %c0_0] : memref<256x36xbf16, #tpu.memory_space<vmem>>, vector<256x36xbf16>
    %c0_1 = arith.constant 0 : index
    %c0_2 = arith.constant 0 : index
    %1 = vector.load %arg2[%c0_1, %c0_2] : memref<36x128xbf16, #tpu.memory_space<vmem>>, vector<36x128xbf16>
    %cst = arith.constant dense<0.000000e+00> : vector<256x128xf32>
    %2 = tpu.matmul %0, %1, %cst {dimension_numbers = #tpu.dot_dimension_numbers<[1], [0], [0], [1], [0, 0, 1, 1], [], []>} : vector<256x36xbf16>, vector<36x128xbf16>, vector<256x128xf32> -> vector<256x128xf32>
    %c0_3 = arith.constant 0 : index
    %c0_4 = arith.constant 0 : index
    %3 = vector.load %arg3[%c0_3, %c0_4] : memref<8x128xf32, #tpu.memory_space<vmem>>, vector<1x128xf32>
    %c1 = arith.constant 1 : index
    %c0_5 = arith.constant 0 : index
    %4 = vector.load %arg3[%c1, %c0_5] : memref<8x128xf32, #tpu.memory_space<vmem>>, vector<1x128xf32>
    %c2 = arith.constant 2 : index
    %c0_6 = arith.constant 0 : index
    %5 = vector.load %arg3[%c2, %c0_6] : memref<8x128xf32, #tpu.memory_space<vmem>>, vector<1x128xf32>
    %c3 = arith.constant 3 : index
    %c0_7 = arith.constant 0 : index
    %6 = vector.load %arg3[%c3, %c0_7] : memref<8x128xf32, #tpu.memory_space<vmem>>, vector<1x128xf32>
    %c4 = arith.constant 4 : index
    %c0_8 = arith.constant 0 : index
    %7 = vector.load %arg3[%c4, %c0_8] : memref<8x128xf32, #tpu.memory_space<vmem>>, vector<1x128xf32>
    %8 = vector.broadcast %3 : vector<1x128xf32> to vector<256x128xf32>
    %9 = arith.addf %2, %8 : vector<256x128xf32>
    %10 = vector.broadcast %4 : vector<1x128xf32> to vector<256x128xf32>
    %11 = arith.maximumf %10, %9 : vector<256x128xf32>
    %12 = vector.broadcast %5 : vector<1x128xf32> to vector<256x128xf32>
    %13 = arith.minimumf %12, %11 : vector<256x128xf32>
    %14 = vector.broadcast %4 : vector<1x128xf32> to vector<256x128xf32>
    %15 = arith.subf %13, %14 : vector<256x128xf32>
    %16 = vector.broadcast %7 : vector<1x128xf32> to vector<256x128xf32>
    %17 = arith.mulf %15, %16 : vector<256x128xf32>
    %18 = math.roundeven %17 : vector<256x128xf32>
    %19 = vector.broadcast %6 : vector<1x128xf32> to vector<256x128xf32>
    %20 = arith.mulf %18, %19 : vector<256x128xf32>
    %21 = vector.broadcast %4 : vector<1x128xf32> to vector<256x128xf32>
    %22 = arith.addf %20, %21 : vector<256x128xf32>
    %c0_9 = arith.constant 0 : index
    %c0_10 = arith.constant 0 : index
    %23 = vector.load %arg4[%c0_9, %c0_10] : memref<256x128xf32, #tpu.memory_space<vmem>>, vector<256x128xf32>
    tpu.vector_store %arg4[%c0_9, %c0_10], %22 {strides = array<i32>} : memref<256x128xf32, #tpu.memory_space<vmem>>, vector<256x128xf32>,
    return
  }
  func.func @transform_0(%arg0: i32) -> (i32, i32) {
    %c0_i32 = arith.constant 0 : i32
    %c0_i32_0 = arith.constant 0 : i32
    return %arg0, %c0_i32 : i32, i32
  }
  func.func @transform_1(%arg0: i32) -> (i32, i32) {
    %c0_i32 = arith.constant 0 : i32
    %c0_i32_0 = arith.constant 0 : i32
    %c0_i32_1 = arith.constant 0 : i32
    return %c0_i32, %c0_i32_0 : i32, i32
  }
  func.func @transform_2(%arg0: i32) -> (i32, i32) {
    %c0_i32 = arith.constant 0 : i32
    %c0_i32_0 = arith.constant 0 : i32
    %c0_i32_1 = arith.constant 0 : i32
    return %c0_i32, %c0_i32_0 : i32, i32
  }
  func.func @transform_3(%arg0: i32) -> (i32, i32) {
    %c0_i32 = arith.constant 0 : i32
    %c0_i32_0 = arith.constant 0 : i32
    return %arg0, %c0_i32 : i32, i32
  }
}

</mosaic_0001>

<llo_original>
// kernel: _fix_conv2d_forward.2
$region0: #{_fix_conv2d_forward.2}
  #allocation0 [shape = 'u32[]', space=smem, size = 0x4, offset = 0x4, fixed_abs, tag = 'smem constant byte address 0x4 - core index']
  #allocation1 [shape = 'u32[144,128]{1,0:T(1,128)}', space=vmem, size = 0x12000, scoped, tag = 'internal scratch']
  %s0 = inlined_call_operand.vmem [shape: bf16[512,36], index: 0, kind: input, shape index: {}]
  %s1 = inlined_call_operand.vmem [shape: bf16[36,128], index: 1, kind: input, shape index: {}]
  %s2 = inlined_call_operand.vmem [shape: f32[1,128], index: 2, kind: input, shape index: {}]
  %s3 = inlined_call_operand.vmem [shape: f32[16,128], index: 3, kind: output, shape index: {0}]
  %s4 = inlined_call_operand.vmem [shape: f32[16,128], index: 4, kind: output, shape index: {1}]
  %5 = xla_tuple %s3, %s4
  %s6 = sld [smem:[#allocation0]]
  $region53: #{_fix_conv2d_forward.2} parent=0
    _
  %s8 = ssub.s32 1, %s6
  %s9 = scalar_select 0, %s8, %s6
  loop: start=0, step=1, limit=4
  $region2: #{_fix_conv2d_forward.2} parent=0 // loop_pre_header
    _
  $region3: #{_fix_conv2d_forward.2} parent=0 // loop_header
    %s11 = sphi 0, %s15
    %p12 = scmp.ge.s32.totalorder %s11, 4
    %s21 = sphi 0, %s23
    %s24 = sphi 0, %s21
    %s25 = sphi 0, %s24
    %s41 = sphi 0, %s25
    %s45 = sphi 0, %s45
    %s47 = sphi 0, %s45
    %s48 = sphi 0, %s47
    %s62 = sphi 0, %s48
    %s66 = sphi 0, %s66
    %s68 = sphi 0, %s66
    %s69 = sphi 0, %s68
    %s83 = sphi 0, %s69
    %s89 = sphi 0, %s91
    %s92 = sphi 0, %s89
    %s93 = sphi 0, %s92
    %s109 = sphi 0, %s93
    %s115 = sphi 0, %s117
    %s118 = sphi 0, %s115
    %s119 = sphi 0, %s118
    %s135 = sphi 0, %s119
  $region4: #{_fix_conv2d_forward.2} parent=0 // loop_header_branch
    %14 = sbr.rel (%p12) target = $region8
  $region5: #{_fix_conv2d_forward.2} parent=0 // loop_body
    %s16 = ssub.s32 %s11, 1
    %s17 = ssub.s32 %s11, 2
    %s18 = sadd.s32 %s11, 1
    %s19 = ssub.s32 %s11, %s18
    %p20 = scmp.eq.s32.totalorder %s19, 0
    %s22 = sadd.s32 %s21, 1
    %s23 = scalar_select %p20, %s21, %s22
    %p26 = pneg %p20
    %p27 = scmp.eq.s32.totalorder %s11, 1
    %p28 = por %p26, %p27
    %p29 = scmp.ne.s32.totalorder %s21, %s24
    %p30 = scmp.eq.s32.totalorder %s11, 0
    %p31 = por %p29, %p30
    %p32 = scmp.ne.s32.totalorder %s21, %s24
    %p33 = scmp.eq.s32.totalorder %s16, 1
    %p34 = por %p32, %p33
    %p35 = scmp.ne.s32.totalorder %s24, %s25
    %p36 = scmp.eq.s32.totalorder %s16, 0
    %p37 = por %p35, %p36
    %p38 = scmp.ne.s32.totalorder %s24, %s25
    %p39 = scmp.eq.s32.totalorder %s17, 1
    %p40 = por %p38, %p39
    %p42 = scmp.ne.s32.totalorder %s25, %s41
    %p43 = scmp.eq.s32.totalorder %s17, 0
    %p44 = por %p42, %p43
    %s46 = sadd.s32 %s45, 1
    %p49 = scmp.eq.s32.totalorder %s11, 1
    %p50 = scmp.ne.s32.totalorder %s45, %s47
    %p51 = scmp.eq.s32.totalorder %s11, 0
    %p52 = por %p50, %p51
    %p53 = scmp.ne.s32.totalorder %s45, %s47
    %p54 = scmp.eq.s32.totalorder %s16, 1
    %p55 = por %p53, %p54
    %p56 = scmp.ne.s32.totalorder %s47, %s48
    %p57 = scmp.eq.s32.totalorder %s16, 0
    %p58 = por %p56, %p57
    %p59 = scmp.ne.s32.totalorder %s47, %s48
    %p60 = scmp.eq.s32.totalorder %s17, 1
    %p61 = por %p59, %p60
    %p63 = scmp.ne.s32.totalorder %s48, %s62
    %p64 = scmp.eq.s32.totalorder %s17, 0
    %p65 = por %p63, %p64
    %s67 = sadd.s32 %s66, 1
    %p70 = scmp.eq.s32.totalorder %s11, 1
    %p71 = scmp.ne.s32.totalorder %s66, %s68
    %p72 = scmp.eq.s32.totalorder %s11, 0
    %p73 = por %p71, %p72
    %p74 = scmp.ne.s32.totalorder %s66, %s68
    %p75 = scmp.eq.s32.totalorder %s16, 1
    %p76 = por %p74, %p75
    %p77 = scmp.ne.s32.totalorder %s68, %s69
    %p78 = scmp.eq.s32.totalorder %s16, 0
    %p79 = por %p77, %p78
    %p80 = scmp.ne.s32.totalorder %s68, %s69
    %p81 = scmp.eq.s32.totalorder %s17, 1
    %p82 = por %p80, %p81
    %p84 = scmp.ne.s32.totalorder %s69, %s83
    %p85 = scmp.eq.s32.totalorder %s17, 0
    %p86 = por %p84, %p85
    %s87 = ssub.s32 %s11, %s18
    %p88 = scmp.eq.s32.totalorder %s87, 0
    %s90 = sadd.s32 %s89, 1
    %s91 = scalar_select %p88, %s89, %s90
    %p94 = pneg %p88
    %p95 = scmp.eq.s32.totalorder %s11, 1
    %p96 = por %p94, %p95
    %p97 = scmp.ne.s32.totalorder %s89, %s92
    %p98 = scmp.eq.s32.totalorder %s11, 0
    %p99 = por %p97, %p98
    %p100 = scmp.ne.s32.totalorder %s89, %s92
    %p101 = scmp.eq.s32.totalorder %s16, 1
    %p102 = por %p100, %p101
    %p103 = scmp.ne.s32.totalorder %s92, %s93
    %p104 = scmp.eq.s32.totalorder %s16, 0
    %p105 = por %p103, %p104
    %p106 = scmp.ne.s32.totalorder %s92, %s93
    %p107 = scmp.eq.s32.totalorder %s17, 1
    %p108 = por %p106, %p107
    %p110 = scmp.ne.s32.totalorder %s93, %s109
    %p111 = scmp.eq.s32.totalorder %s17, 0
    %p112 = por %p110, %p111
    %s113 = ssub.s32 %s11, %s18
    %p114 = scmp.eq.s32.totalorder %s113, 0
    %s116 = sadd.s32 %s115, 1
    %s117 = scalar_select %p114, %s115, %s116
    %p120 = pneg %p114
    %p121 = scmp.eq.s32.totalorder %s11, 1
    %p122 = por %p120, %p121
    %p123 = scmp.ne.s32.totalorder %s115, %s118
    %p124 = scmp.eq.s32.totalorder %s11, 0
    %p125 = por %p123, %p124
    %p126 = scmp.ne.s32.totalorder %s115, %s118
    %p127 = scmp.eq.s32.totalorder %s16, 1
    %p128 = por %p126, %p127
    %p129 = scmp.ne.s32.totalorder %s118, %s119
    %p130 = scmp.eq.s32.totalorder %s16, 0
    %p131 = por %p129, %p130
    %p132 = scmp.ne.s32.totalorder %s118, %s119
    %p133 = scmp.eq.s32.totalorder %s17, 1
    %p134 = por %p132, %p133
    %p136 = scmp.ne.s32.totalorder %s119, %s135
    %p137 = scmp.eq.s32.totalorder %s17, 0
    %p138 = por %p136, %p137
    %p139 = scmp.le.s32.totalorder 1, %s11
    %p140 = scmp.lt.s32.totalorder %s11, 3
    %p141 = pnand %p139, %p140
    %p142 = pneg %p141
    // Predicated region
    $region9: #{_fix_conv2d_forward.2} parent=5 // pred_check
      _
    $region10: #{_fix_conv2d_forward.2} parent=5 // pred_check_branch
      %144 = sbr.rel (%p141) target = $region12
    $region11: #{_fix_conv2d_forward.2} parent=5 // pred_region
      %s145 = ssub.s32 %s11, 1
      // Predicated region
      $region13: #{_fix_conv2d_forward.2} parent=11 // pred_check
        %p146 = pneg %p58
      $region14: #{_fix_conv2d_forward.2} parent=11 // pred_check_branch
        %148 = sbr.rel (%p146) target = $region16
      $region15: #{_fix_conv2d_forward.2} parent=11 // pred_region
        _
      $region16: #{_fix_conv2d_forward.2} parent=11 // pred_fallthru
        _
      // Predicated region
      $region17: #{_fix_conv2d_forward.2} parent=11 // pred_check
        %p149 = pneg %p79
      $region18: #{_fix_conv2d_forward.2} parent=11 // pred_check_branch
        %151 = sbr.rel (%p149) target = $region20
      $region19: #{_fix_conv2d_forward.2} parent=11 // pred_region
        _
      $region20: #{_fix_conv2d_forward.2} parent=11 // pred_fallthru
        _
    $region12: #{_fix_conv2d_forward.2} parent=5 // pred_fallthru
      _
    %p152 = scmp.lt.s32.totalorder %s11, 2
    // Predicated region
    $region21: #{_fix_conv2d_forward.2} parent=5 // pred_check
      %p153 = pneg %p152
    $region22: #{_fix_conv2d_forward.2} parent=5 // pred_check_branch
      %155 = sbr.rel (%p153) target = $region24
    $region23: #{_fix_conv2d_forward.2} parent=5 // pred_region
      // Predicated region
      $region25: #{_fix_conv2d_forward.2} parent=23 // pred_check
        %p156 = pneg %p31
      $region26: #{_fix_conv2d_forward.2} parent=23 // pred_check_branch
        %158 = sbr.rel (%p156) target = $region28
      $region27: #{_fix_conv2d_forward.2} parent=23 // pred_region
        %s159 = smul.u32 32, %s11
        %p160 = scmp.lt.s32.totalorder %s159, 63
        %s161 = scalar_select %p160, %s159, 63
        %s162 = smul.addr %s161, 4
        %s163 = scalar_lea.vmem %s0, %s162
        %s164 = smul.u32 32, %s11
      $region28: #{_fix_conv2d_forward.2} parent=23 // pred_fallthru
        _
    $region24: #{_fix_conv2d_forward.2} parent=5 // pred_fallthru
      _
    %p165 = scmp.le.s32.totalorder 1, %s11
    %p166 = scmp.lt.s32.totalorder %s11, 3
    %p167 = pnand %p165, %p166
    %p168 = pneg %p167
    // Predicated region
    $region29: #{_fix_conv2d_forward.2} parent=5 // pred_check
      _
    $region30: #{_fix_conv2d_forward.2} parent=5 // pred_check_branch
      %170 = sbr.rel (%p167) target = $region32
    $region31: #{_fix_conv2d_forward.2} parent=5 // pred_region
      %s171 = ssub.s32 %s11, 1
      %s172 = smul.u32 32, %s16
      %p173 = scmp.lt.s32.totalorder %s172, 63
      %s174 = scalar_select %p173, %s172, 63
      %s175 = smul.addr %s174, 4
      %s176 = scalar_lea.vmem %s0, %s175
      %p177 = pneg %p37
      %p178 = pneg %p34
      %p179 = pneg %p58
      %p180 = pneg %p55
      %p181 = pneg %p79
      %p182 = pneg %p76
      %p183 = pneg %p105
      %p184 = pneg %p102
      %p185 = scmp.lt.s32.totalorder %s16, 1
      %s186 = scalar_select %p185, %s16, 1
      %s187 = smul.addr %s186, 8
      %s188 = scalar_lea.vmem %s3, %s187
      %p189 = pneg %p131
      %p190 = pneg %p128
      %p191 = scmp.lt.s32.totalorder %s16, 1
      %s192 = scalar_select %p191, %s16, 1
      %s193 = smul.addr %s192, 8
      %s194 = scalar_lea.vmem %s4, %s193
      %s195 = smul.u32 32, %s16
      %p196 = scmp.lt.s32.totalorder %s195, 63
      %s197 = scalar_select %p196, %s195, 63
      %s198 = smul.addr %s197, 4
      %s199 = scalar_lea.vmem %s0, %s198
      %s200 = smul.u32 32, %s16
      %p201 = scmp.lt.s32.totalorder %s16, 1
      %s202 = scalar_select %p201, %s16, 1
      %s203 = smul.addr %s202, 8
      %s204 = scalar_lea.vmem %s3, %s203
      %p205 = scmp.lt.s32.totalorder %s16, 1
      %s206 = scalar_select %p205, %s16, 1
      %s207 = smul.addr %s206, 8
      %s208 = scalar_lea.vmem %s4, %s207
      %v210 = vld [vmem:[%s199] sm:$0xf]
      %v211 = vld [vmem:[%s199 + $0x4] sm:$0xf]
      %v212 = vld [vmem:[%s199 + $0x8] sm:$0xf]
      %v213 = vld [vmem:[%s199 + $0xc] sm:$0xf]
      %v214 = vld [vmem:[%s199 + $0x10] sm:$0xf]
      %v215 = vld [vmem:[%s199 + $0x14] sm:$0xf]
      %v216 = vld [vmem:[%s199 + $0x18] sm:$0xf]
      %v217 = vld [vmem:[%s199 + $0x1c] sm:$0xf]
      %v218 = vld [vmem:[%s199 + $0x20] sm:$0xf]
      %v219 = vld [vmem:[%s199 + $0x24] sm:$0xf]
      %v220 = vld [vmem:[%s199 + $0x28] sm:$0xf]
      %v221 = vld [vmem:[%s199 + $0x2c] sm:$0xf]
      %v222 = vld [vmem:[%s199 + $0x30] sm:$0xf]
      %v223 = vld [vmem:[%s199 + $0x34] sm:$0xf]
      %v224 = vld [vmem:[%s199 + $0x38] sm:$0xf]
      %v225 = vld [vmem:[%s199 + $0x3c] sm:$0xf]
      %v226 = vld [vmem:[%s199 + $0x40] sm:$0xf]
      %v227 = vld [vmem:[%s199 + $0x44] sm:$0xf]
      %v228 = vld [vmem:[%s199 + $0x48] sm:$0xf]
      %v229 = vld [vmem:[%s199 + $0x4c] sm:$0xf]
      %v230 = vld [vmem:[%s199 + $0x50] sm:$0xf]
      %v231 = vld [vmem:[%s199 + $0x54] sm:$0xf]
      %v232 = vld [vmem:[%s199 + $0x58] sm:$0xf]
      %v233 = vld [vmem:[%s199 + $0x5c] sm:$0xf]
      %v234 = vld [vmem:[%s199 + $0x60] sm:$0xf]
      %v235 = vld [vmem:[%s199 + $0x64] sm:$0xf]
      %v236 = vld [vmem:[%s199 + $0x68] sm:$0xf]
      %v237 = vld [vmem:[%s199 + $0x6c] sm:$0xf]
      %v238 = vld [vmem:[%s199 + $0x70] sm:$0xf]
      %v239 = vld [vmem:[%s199 + $0x74] sm:$0xf]
      %v240 = vld [vmem:[%s199 + $0x78] sm:$0xf]
      %v241 = vld [vmem:[%s199 + $0x7c] sm:$0xf]
      %v242 = vld [vmem:[%s1] sm:$0xf]
      %v243 = vld [vmem:[%s1 + $0x4] sm:$0xf]
      %v244 = vld [vmem:[%s1 + $0x8] sm:$0xf]
      %v245 = vld [vmem:[%s1 + $0xc] sm:$0xf]
      %v246 = vld [vmem:[%s1 + $0x10] sm:$0x3]
      %v247 = vld [vmem:[%s2] sm:$0x1]
      %v249 = vlaneseq
      %v250 = vshrl.u32 %v249, 7
      %v251 = vsub.s32 0, %v250
      %v252 = vrot.slane %v247, %v251
      %v286 = vunpack.c.l.b16 %v210
      %v287 = vunpack.c.l.b16 %v211
      %v288 = vunpack.c.l.b16 %v212
      %v289 = vunpack.c.l.b16 %v213
      %v290 = vunpack.c.l.b16 %v214
      %v291 = vunpack.c.l.b16 %v215
      %v292 = vunpack.c.l.b16 %v216
      %v293 = vunpack.c.l.b16 %v217
      %v294 = vunpack.c.l.b16 %v218
      %v295 = vunpack.c.l.b16 %v219
      %v296 = vunpack.c.l.b16 %v220
      %v297 = vunpack.c.l.b16 %v221
      %v298 = vunpack.c.l.b16 %v222
      %v299 = vunpack.c.l.b16 %v223
      %v300 = vunpack.c.l.b16 %v224
      %v301 = vunpack.c.l.b16 %v225
      %v302 = vunpack.c.l.b16 %v226
      %v303 = vunpack.c.l.b16 %v227
      %v304 = vunpack.c.l.b16 %v228
      %v305 = vunpack.c.l.b16 %v229
      %v306 = vunpack.c.l.b16 %v230
      %v307 = vunpack.c.l.b16 %v231
      %v308 = vunpack.c.l.b16 %v232
      %v309 = vunpack.c.l.b16 %v233
      %v310 = vunpack.c.l.b16 %v234
      %v311 = vunpack.c.l.b16 %v235
      %v312 = vunpack.c.l.b16 %v236
      %v313 = vunpack.c.l.b16 %v237
      %v314 = vunpack.c.l.b16 %v238
      %v315 = vunpack.c.l.b16 %v239
      %v316 = vunpack.c.l.b16 %v240
      %v317 = vunpack.c.l.b16 %v241
      %v318 = vpack.c.b16 %v287, %v286
      %v319 = vpack.c.b16 %v289, %v288
      %v320 = vpack.c.b16 %v291, %v290
      %v321 = vpack.c.b16 %v293, %v292
      %v322 = vpack.c.b16 %v295, %v294
      %v323 = vpack.c.b16 %v297, %v296
      %v324 = vpack.c.b16 %v299, %v298
      %v325 = vpack.c.b16 %v301, %v300
      %v326 = vpack.c.b16 %v303, %v302
      %v327 = vpack.c.b16 %v305, %v304
      %v328 = vpack.c.b16 %v307, %v306
      %v329 = vpack.c.b16 %v309, %v308
      %v330 = vpack.c.b16 %v311, %v310
      %v331 = vpack.c.b16 %v313, %v312
      %v332 = vpack.c.b16 %v315, %v314
      %v333 = vpack.c.b16 %v317, %v316
      %v339 = vunpack.c.l.b16 %v242
      %v340 = vunpack.c.l.b16 %v243
      %v341 = vunpack.c.l.b16 %v244
      %v342 = vunpack.c.l.b16 %v245
      %v343 = vunpack.c.l.b16 %v246
      %v344 = vpack.c.b16 %v340, %v339
      %v345 = vpack.c.b16 %v342, %v341
      %v346 = vpack.c.b16 %v343, %v343
      %vm349 = vcmask 293888
      %v351 = vsel %vm349, %v318, 0
      %v354 = vsel %vm349, %v319, 0
      %v357 = vsel %vm349, %v320, 0
      %v360 = vsel %vm349, %v321, 0
      %v363 = vsel %vm349, %v322, 0
      %v366 = vsel %vm349, %v323, 0
      %v369 = vsel %vm349, %v324, 0
      %v372 = vsel %vm349, %v325, 0
      %v375 = vsel %vm349, %v326, 0
      %v378 = vsel %vm349, %v327, 0
      %v381 = vsel %vm349, %v328, 0
      %v384 = vsel %vm349, %v329, 0
      %v387 = vsel %vm349, %v330, 0
      %v390 = vsel %vm349, %v331, 0
      %v393 = vsel %vm349, %v332, 0
      %v396 = vsel %vm349, %v333, 0
      %vm398 = vcmask 1041408
      %v400 = vsel %vm398, %v346, 0
      %402 = vmatprep.subr.bf16.mxu0 0
      %403 = vmatpush1.bf16.msra.mxu0 %v344
      %404 = vmatprep.subr.bf16.mxu0 0
      %405 = vmatpush1.bf16.msra.mxu0 %v345
      %406 = vmatprep.subr.bf16.mxu0 0
      %407 = vmatpush1.bf16.msra.mxu0 %v400
      %408 = vmatprep.subr.bf16.mxu0 0
      %409 = vmatpush1.bf16.msra.mxu0 0
      %410 = vmatprep.subr.bf16.mxu0 0
      %411 = vmatpush1.bf16.msra.mxu0 0
      %412 = vmatprep.subr.bf16.mxu0 0
      %413 = vmatpush1.bf16.msra.mxu0 0
      %414 = vmatprep.subr.bf16.mxu0 0
      %415 = vmatpush1.bf16.msra.mxu0 0
      %416 = vmatprep.subr.bf16.mxu0 0
      %417 = vmatpush1.bf16.msra.mxu0 0
      %418 = vmatprep.subr.bf16.mxu0 0
      %419 = vmatpush1.bf16.msra.mxu0 0
      %420 = vmatprep.subr.bf16.mxu0 0
      %421 = vmatpush1.bf16.msra.mxu0 0
      %422 = vmatprep.subr.bf16.mxu0 0
      %423 = vmatpush1.bf16.msra.mxu0 0
      %424 = vmatprep.subr.bf16.mxu0 0
      %425 = vmatpush1.bf16.msra.mxu0 0
      %426 = vmatprep.subr.bf16.mxu0 0
      %427 = vmatpush1.bf16.msra.mxu0 0
      %428 = vmatprep.subr.bf16.mxu0 0
      %429 = vmatpush1.bf16.msra.mxu0 0
      %430 = vmatprep.subr.bf16.mxu0 0
      %431 = vmatpush1.bf16.msra.mxu0 0
      %432 = vmatprep.subr.bf16.mxu0 0
      %433 = vmatpush1.bf16.msra.mxu0 0
      %434 = vmatprep.mubr.bf16.mxu0 0
      %435 = vmatmul.mubr.bf16.gmra.mrb[0].mxu0 %v351
      %v436 = vpop.f32.mrb[0].mxu0
      %v437 = vadd.f32 %v252, %v436
      %v438 = vpop.f32.mrb[0].mxu0
      %v439 = vpop.f32.mrb[0].mxu0
      %v440 = vadd.f32 %v252, %v439
      %v441 = vpop.f32.mrb[0].mxu0
      %442 = vmatprep.mubr.bf16.mxu0 0
      %443 = vmatmul.mubr.bf16.gmra.mrb[0].mxu0 %v354
      %v444 = vpop.f32.mrb[0].mxu0
      %v445 = vadd.f32 %v252, %v444
      %v446 = vpop.f32.mrb[0].mxu0
      %v447 = vpop.f32.mrb[0].mxu0
      %v448 = vadd.f32 %v252, %v447
      %v449 = vpop.f32.mrb[0].mxu0
      %450 = vmatprep.mubr.bf16.mxu0 0
      %451 = vmatmul.mubr.bf16.gmra.mrb[0].mxu0 %v357
      %v452 = vpop.f32.mrb[0].mxu0
      %v453 = vadd.f32 %v252, %v452
      %v454 = vpop.f32.mrb[0].mxu0
      %v455 = vpop.f32.mrb[0].mxu0
      %v456 = vadd.f32 %v252, %v455
      %v457 = vpop.f32.mrb[0].mxu0
      %458 = vmatprep.mubr.bf16.mxu0 0
      %459 = vmatmul.mubr.bf16.gmra.mrb[0].mxu0 %v360
      %v460 = vpop.f32.mrb[0].mxu0
      %v461 = vadd.f32 %v252, %v460
      %v462 = vpop.f32.mrb[0].mxu0
      %v463 = vpop.f32.mrb[0].mxu0
      %v464 = vadd.f32 %v252, %v463
      %v465 = vpop.f32.mrb[0].mxu0
      %466 = vmatprep.mubr.bf16.mxu0 0
      %467 = vmatmul.mubr.bf16.gmra.mrb[0].mxu0 %v363
      %v468 = vpop.f32.mrb[0].mxu0
      %v469 = vadd.f32 %v252, %v468
      %v470 = vpop.f32.mrb[0].mxu0
      %v471 = vpop.f32.mrb[0].mxu0
      %v472 = vadd.f32 %v252, %v471
      %v473 = vpop.f32.mrb[0].mxu0
      %474 = vmatprep.mubr.bf16.mxu0 0
      %475 = vmatmul.mubr.bf16.gmra.mrb[0].mxu0 %v366
      %v476 = vpop.f32.mrb[0].mxu0
      %v477 = vadd.f32 %v252, %v476
      %v478 = vpop.f32.mrb[0].mxu0
      %v479 = vpop.f32.mrb[0].mxu0
      %v480 = vadd.f32 %v252, %v479
      %v481 = vpop.f32.mrb[0].mxu0
      %482 = vmatprep.mubr.bf16.mxu0 0
      %483 = vmatmul.mubr.bf16.gmra.mrb[0].mxu0 %v369
      %v484 = vpop.f32.mrb[0].mxu0
      %v485 = vadd.f32 %v252, %v484
      %v486 = vpop.f32.mrb[0].mxu0
      %v487 = vpop.f32.mrb[0].mxu0
      %v488 = vadd.f32 %v252, %v487
      %v489 = vpop.f32.mrb[0].mxu0
      %490 = vmatprep.mubr.bf16.mxu0 0
      %491 = vmatmul.mubr.bf16.gmra.mrb[0].mxu0 %v372
      %v492 = vpop.f32.mrb[0].mxu0
      %v493 = vadd.f32 %v252, %v492
      %v494 = vpop.f32.mrb[0].mxu0
      %v495 = vpop.f32.mrb[0].mxu0
      %v496 = vadd.f32 %v252, %v495
      %v497 = vpop.f32.mrb[0].mxu0
      %498 = vmatprep.mubr.bf16.mxu0 0
      %499 = vmatmul.mubr.bf16.gmra.mrb[0].mxu0 %v375
      %v500 = vpop.f32.mrb[0].mxu0
      %v501 = vadd.f32 %v252, %v500
      %v502 = vpop.f32.mrb[0].mxu0
      %v503 = vpop.f32.mrb[0].mxu0
      %v504 = vadd.f32 %v252, %v503
      %v505 = vpop.f32.mrb[0].mxu0
      %506 = vmatprep.mubr.bf16.mxu0 0
      %507 = vmatmul.mubr.bf16.gmra.mrb[0].mxu0 %v378
      %v508 = vpop.f32.mrb[0].mxu0
      %v509 = vadd.f32 %v252, %v508
      %v510 = vpop.f32.mrb[0].mxu0
      %v511 = vpop.f32.mrb[0].mxu0
      %v512 = vadd.f32 %v252, %v511
      %v513 = vpop.f32.mrb[0].mxu0
      %514 = vmatprep.mubr.bf16.mxu0 0
      %515 = vmatmul.mubr.bf16.gmra.mrb[0].mxu0 %v381
      %v516 = vpop.f32.mrb[0].mxu0
      %v517 = vadd.f32 %v252, %v516
      %v518 = vpop.f32.mrb[0].mxu0
      %v519 = vpop.f32.mrb[0].mxu0
      %v520 = vadd.f32 %v252, %v519
      %v521 = vpop.f32.mrb[0].mxu0
      %522 = vmatprep.mubr.bf16.mxu0 0
      %523 = vmatmul.mubr.bf16.gmra.mrb[0].mxu0 %v384
      %v524 = vpop.f32.mrb[0].mxu0
      %v525 = vadd.f32 %v252, %v524
      %v526 = vpop.f32.mrb[0].mxu0
      %v527 = vpop.f32.mrb[0].mxu0
      %v528 = vadd.f32 %v252, %v527
      %v529 = vpop.f32.mrb[0].mxu0
      %530 = vmatprep.mubr.bf16.mxu0 0
      %531 = vmatmul.mubr.bf16.gmra.mrb[0].mxu0 %v387
      %v532 = vpop.f32.mrb[0].mxu0
      %v533 = vadd.f32 %v252, %v532
      %v534 = vpop.f32.mrb[0].mxu0
      %v535 = vpop.f32.mrb[0].mxu0
      %v536 = vadd.f32 %v252, %v535
      %v537 = vpop.f32.mrb[0].mxu0
      %538 = vmatprep.mubr.bf16.mxu0 0
      %539 = vmatmul.mubr.bf16.gmra.mrb[0].mxu0 %v390
      %v540 = vpop.f32.mrb[0].mxu0
      %v541 = vadd.f32 %v252, %v540
      %v542 = vpop.f32.mrb[0].mxu0
      %v543 = vpop.f32.mrb[0].mxu0
      %v544 = vadd.f32 %v252, %v543
      %v545 = vpop.f32.mrb[0].mxu0
      %546 = vmatprep.mubr.bf16.mxu0 0
      %547 = vmatmul.mubr.bf16.gmra.mrb[0].mxu0 %v393
      %v548 = vpop.f32.mrb[0].mxu0
      %v549 = vadd.f32 %v252, %v548
      %v550 = vpop.f32.mrb[0].mxu0
      %v551 = vpop.f32.mrb[0].mxu0
      %v552 = vadd.f32 %v252, %v551
      %v553 = vpop.f32.mrb[0].mxu0
      %554 = vmatprep.mubr.bf16.mxu0 0
      %555 = vmatmul.mubr.bf16.gmra.mrb[0].mxu0 %v396
      %v556 = vpop.f32.mrb[0].mxu0
      %v557 = vadd.f32 %v252, %v556
      %v558 = vpop.f32.mrb[0].mxu0
      %v559 = vpop.f32.mrb[0].mxu0
      %v560 = vadd.f32 %v252, %v559
      %v561 = vpop.f32.mrb[0].mxu0
      %562 = vdwg.mxu0
      %v563 = vlaneseq
      %v564 = vshrl.u32 %v563, 7
      %v565 = vadd.s32 %v564, 8
      %v566 = vadd.s32 %v564, 16
      %v567 = vadd.s32 %v564, 24
      %v568 = vadd.s32 %v564, 32
      %v569 = vadd.s32 %v564, 40
      %v570 = vadd.s32 %v564, 48
      %v571 = vadd.s32 %v564, 56
      %v572 = vadd.s32 %v564, 64
      %v573 = vadd.s32 %v564, 72
      %v574 = vadd.s32 %v564, 80
      %v575 = vadd.s32 %v564, 88
      %v576 = vadd.s32 %v564, 96
      %v577 = vadd.s32 %v564, 104
      %v578 = vadd.s32 %v564, 112
      %v579 = vadd.s32 %v564, 120
      %v580 = vadd.s32 %v564, 128
      %v581 = vadd.s32 %v564, 136
      %v582 = vadd.s32 %v564, 144
      %v583 = vadd.s32 %v564, 152
      %v584 = vadd.s32 %v564, 160
      %v585 = vadd.s32 %v564, 168
      %v586 = vadd.s32 %v564, 176
      %v587 = vadd.s32 %v564, 184
      %v588 = vadd.s32 %v564, 192
      %v589 = vadd.s32 %v564, 200
      %v590 = vadd.s32 %v564, 208
      %v591 = vadd.s32 %v564, 216
      %v592 = vadd.s32 %v564, 224
      %v593 = vadd.s32 %v564, 232
      %v594 = vadd.s32 %v564, 240
      %v595 = vadd.s32 %v564, 248
      %s596 = smul.u32 %s16, 256
      %v597 = vstv %s596
      %v598 = vadd.s32 %v564, %v597
      %v599 = vadd.s32 %v565, %v597
      %v600 = vadd.s32 %v566, %v597
      %v601 = vadd.s32 %v567, %v597
      %v602 = vadd.s32 %v568, %v597
      %v603 = vadd.s32 %v569, %v597
      %v604 = vadd.s32 %v570, %v597
      %v605 = vadd.s32 %v571, %v597
      %v606 = vadd.s32 %v572, %v597
      %v607 = vadd.s32 %v573, %v597
      %v608 = vadd.s32 %v574, %v597
      %v609 = vadd.s32 %v575, %v597
      %v610 = vadd.s32 %v576, %v597
      %v611 = vadd.s32 %v577, %v597
      %v612 = vadd.s32 %v578, %v597
      %v613 = vadd.s32 %v579, %v597
      %v614 = vadd.s32 %v580, %v597
      %v615 = vadd.s32 %v581, %v597
      %v616 = vadd.s32 %v582, %v597
      %v617 = vadd.s32 %v583, %v597
      %v618 = vadd.s32 %v584, %v597
      %v619 = vadd.s32 %v585, %v597
      %v620 = vadd.s32 %v586, %v597
      %v621 = vadd.s32 %v587, %v597
      %v622 = vadd.s32 %v588, %v597
      %v623 = vadd.s32 %v589, %v597
      %v624 = vadd.s32 %v590, %v597
      %v625 = vadd.s32 %v591, %v597
      %v626 = vadd.s32 %v592, %v597
      %v627 = vadd.s32 %v593, %v597
      %v628 = vadd.s32 %v594, %v597
      %v629 = vadd.s32 %v595, %v597
      %vm630 = vcmp.lt.s32.totalorder %v598, 512
      %vm631 = vcmp.lt.s32.totalorder %v599, 512
      %vm632 = vcmp.lt.s32.totalorder %v600, 512
      %vm633 = vcmp.lt.s32.totalorder %v601, 512
      %vm634 = vcmp.lt.s32.totalorder %v602, 512
      %vm635 = vcmp.lt.s32.totalorder %v603, 512
      %vm636 = vcmp.lt.s32.totalorder %v604, 512
      %vm637 = vcmp.lt.s32.totalorder %v605, 512
      %vm638 = vcmp.lt.s32.totalorder %v606, 512
      %vm639 = vcmp.lt.s32.totalorder %v607, 512
      %vm640 = vcmp.lt.s32.totalorder %v608, 512
      %vm641 = vcmp.lt.s32.totalorder %v609, 512
      %vm642 = vcmp.lt.s32.totalorder %v610, 512
      %vm643 = vcmp.lt.s32.totalorder %v611, 512
      %vm644 = vcmp.lt.s32.totalorder %v612, 512
      %vm645 = vcmp.lt.s32.totalorder %v613, 512
      %vm646 = vcmp.lt.s32.totalorder %v614, 512
      %vm647 = vcmp.lt.s32.totalorder %v615, 512
      %vm648 = vcmp.lt.s32.totalorder %v616, 512
      %vm649 = vcmp.lt.s32.totalorder %v617, 512
      %vm650 = vcmp.lt.s32.totalorder %v618, 512
      %vm651 = vcmp.lt.s32.totalorder %v619, 512
      %vm652 = vcmp.lt.s32.totalorder %v620, 512
      %vm653 = vcmp.lt.s32.totalorder %v621, 512
      %vm654 = vcmp.lt.s32.totalorder %v622, 512
      %vm655 = vcmp.lt.s32.totalorder %v623, 512
      %vm656 = vcmp.lt.s32.totalorder %v624, 512
      %vm657 = vcmp.lt.s32.totalorder %v625, 512
      %vm658 = vcmp.lt.s32.totalorder %v626, 512
      %vm659 = vcmp.lt.s32.totalorder %v627, 512
      %vm660 = vcmp.lt.s32.totalorder %v628, 512
      %vm661 = vcmp.lt.s32.totalorder %v629, 512
      %v662 = vsel %vm630, 1, 0
      %v663 = vsel %vm631, 1, 0
      %v664 = vsel %vm632, 1, 0
      %v665 = vsel %vm633, 1, 0
      %v666 = vsel %vm634, 1, 0
      %v667 = vsel %vm635, 1, 0
      %v668 = vsel %vm636, 1, 0
      %v669 = vsel %vm637, 1, 0
      %v670 = vsel %vm638, 1, 0
      %v671 = vsel %vm639, 1, 0
      %v672 = vsel %vm640, 1, 0
      %v673 = vsel %vm641, 1, 0
      %v674 = vsel %vm642, 1, 0
      %v675 = vsel %vm643, 1, 0
      %v676 = vsel %vm644, 1, 0
      %v677 = vsel %vm645, 1, 0
      %v678 = vsel %vm646, 1, 0
      %v679 = vsel %vm647, 1, 0
      %v680 = vsel %vm648, 1, 0
      %v681 = vsel %vm649, 1, 0
      %v682 = vsel %vm650, 1, 0
      %v683 = vsel %vm651, 1, 0
      %v684 = vsel %vm652, 1, 0
      %v685 = vsel %vm653, 1, 0
      %v686 = vsel %vm654, 1, 0
      %v687 = vsel %vm655, 1, 0
      %v688 = vsel %vm656, 1, 0
      %v689 = vsel %vm657, 1, 0
      %v690 = vsel %vm658, 1, 0
      %v691 = vsel %vm659, 1, 0
      %v692 = vsel %vm660, 1, 0
      %v693 = vsel %vm661, 1, 0
      %vm694 = vcmp.eq.s32.totalorder %v662, 1
      %vm695 = vcmp.eq.s32.totalorder %v663, 1
      %vm696 = vcmp.eq.s32.totalorder %v664, 1
      %vm697 = vcmp.eq.s32.totalorder %v665, 1
      %vm698 = vcmp.eq.s32.totalorder %v666, 1
      %vm699 = vcmp.eq.s32.totalorder %v667, 1
      %vm700 = vcmp.eq.s32.totalorder %v668, 1
      %vm701 = vcmp.eq.s32.totalorder %v669, 1
      %vm702 = vcmp.eq.s32.totalorder %v670, 1
      %vm703 = vcmp.eq.s32.totalorder %v671, 1
      %vm704 = vcmp.eq.s32.totalorder %v672, 1
      %vm705 = vcmp.eq.s32.totalorder %v673, 1
      %vm706 = vcmp.eq.s32.totalorder %v674, 1
      %vm707 = vcmp.eq.s32.totalorder %v675, 1
      %vm708 = vcmp.eq.s32.totalorder %v676, 1
      %vm709 = vcmp.eq.s32.totalorder %v677, 1
      %vm710 = vcmp.eq.s32.totalorder %v678, 1
      %vm711 = vcmp.eq.s32.totalorder %v679, 1
      %vm712 = vcmp.eq.s32.totalorder %v680, 1
      %vm713 = vcmp.eq.s32.totalorder %v681, 1
      %vm714 = vcmp.eq.s32.totalorder %v682, 1
      %vm715 = vcmp.eq.s32.totalorder %v683, 1
      %vm716 = vcmp.eq.s32.totalorder %v684, 1
      %vm717 = vcmp.eq.s32.totalorder %v685, 1
      %vm718 = vcmp.eq.s32.totalorder %v686, 1
      %vm719 = vcmp.eq.s32.totalorder %v687, 1
      %vm720 = vcmp.eq.s32.totalorder %v688, 1
      %vm721 = vcmp.eq.s32.totalorder %v689, 1
      %vm722 = vcmp.eq.s32.totalorder %v690, 1
      %vm723 = vcmp.eq.s32.totalorder %v691, 1
      %vm724 = vcmp.eq.s32.totalorder %v692, 1
      %vm725 = vcmp.eq.s32.totalorder %v693, 1
      %v726 = vsel %vm694, %v437, -inf
      %v727 = vsel %vm695, %v440, -inf
      %v728 = vsel %vm696, %v445, -inf
      %v729 = vsel %vm697, %v448, -inf
      %v730 = vsel %vm698, %v453, -inf
      %v731 = vsel %vm699, %v456, -inf
      %v732 = vsel %vm700, %v461, -inf
      %v733 = vsel %vm701, %v464, -inf
      %v734 = vsel %vm702, %v469, -inf
      %v735 = vsel %vm703, %v472, -inf
      %v736 = vsel %vm704, %v477, -inf
      %v737 = vsel %vm705, %v480, -inf
      %v738 = vsel %vm706, %v485, -inf
      %v739 = vsel %vm707, %v488, -inf
      %v740 = vsel %vm708, %v493, -inf
      %v741 = vsel %vm709, %v496, -inf
      %v742 = vsel %vm710, %v501, -inf
      %v743 = vsel %vm711, %v504, -inf
      %v744 = vsel %vm712, %v509, -inf
      %v745 = vsel %vm713, %v512, -inf
      %v746 = vsel %vm714, %v517, -inf
      %v747 = vsel %vm715, %v520, -inf
      %v748 = vsel %vm716, %v525, -inf
      %v749 = vsel %vm717, %v528, -inf
      %v750 = vsel %vm718, %v533, -inf
      %v751 = vsel %vm719, %v536, -inf
      %v752 = vsel %vm720, %v541, -inf
      %v753 = vsel %vm721, %v544, -inf
      %v754 = vsel %vm722, %v549, -inf
      %v755 = vsel %vm723, %v552, -inf
      %v756 = vsel %vm724, %v557, -inf
      %v757 = vsel %vm725, %v560, -inf
      %v758 = vmax.f32 %v726, %v730
      %v759 = vmax.f32 %v727, %v731
      %v760 = vmax.f32 %v728, %v732
      %v761 = vmax.f32 %v729, %v733
      %v762 = vmax.f32 %v758, %v734
      %v763 = vmax.f32 %v759, %v735
      %v764 = vmax.f32 %v760, %v736
      %v765 = vmax.f32 %v761, %v737
      %v766 = vmax.f32 %v762, %v738
      %v767 = vmax.f32 %v763, %v739
      %v768 = vmax.f32 %v764, %v740
      %v769 = vmax.f32 %v765, %v741
      %v770 = vmax.f32 %v766, %v742
      %v771 = vmax.f32 %v767, %v743
      %v772 = vmax.f32 %v768, %v744
      %v773 = vmax.f32 %v769, %v745
      %v774 = vmax.f32 %v770, %v746
      %v775 = vmax.f32 %v771, %v747
      %v776 = vmax.f32 %v772, %v748
      %v777 = vmax.f32 %v773, %v749
      %v778 = vmax.f32 %v774, %v750
      %v779 = vmax.f32 %v775, %v751
      %v780 = vmax.f32 %v776, %v752
      %v781 = vmax.f32 %v777, %v753
      %v782 = vmax.f32 %v778, %v754
      %v783 = vmax.f32 %v779, %v755
      %v784 = vmax.f32 %v780, %v756
      %v785 = vmax.f32 %v781, %v757
      %v786 = vmax.f32 %v782, %v783
      %v787 = vmax.f32 %v784, %v785
      %v788 = vmax.f32 %v786, %v787
      %v789 = vrot.slane %v788, 4
      %v790 = vmax.f32 %v788, %v789
      %v791 = vrot.slane %v790, 2
      %v792 = vmax.f32 %v790, %v791
      %v793 = vrot.slane %v792, 1
      %v794 = vmax.f32 %v792, %v793
      %v795 = vsel %vm694, %v437, inf
      %v796 = vsel %vm695, %v440, inf
      %v797 = vsel %vm696, %v445, inf
      %v798 = vsel %vm697, %v448, inf
      %v799 = vsel %vm698, %v453, inf
      %v800 = vsel %vm699, %v456, inf
      %v801 = vsel %vm700, %v461, inf
      %v802 = vsel %vm701, %v464, inf
      %v803 = vsel %vm702, %v469, inf
      %v804 = vsel %vm703, %v472, inf
      %v805 = vsel %vm704, %v477, inf
      %v806 = vsel %vm705, %v480, inf
      %v807 = vsel %vm706, %v485, inf
      %v808 = vsel %vm707, %v488, inf
      %v809 = vsel %vm708, %v493, inf
      %v810 = vsel %vm709, %v496, inf
      %v811 = vsel %vm710, %v501, inf
      %v812 = vsel %vm711, %v504, inf
      %v813 = vsel %vm712, %v509, inf
      %v814 = vsel %vm713, %v512, inf
      %v815 = vsel %vm714, %v517, inf
      %v816 = vsel %vm715, %v520, inf
      %v817 = vsel %vm716, %v525, inf
      %v818 = vsel %vm717, %v528, inf
      %v819 = vsel %vm718, %v533, inf
      %v820 = vsel %vm719, %v536, inf
      %v821 = vsel %vm720, %v541, inf
      %v822 = vsel %vm721, %v544, inf
      %v823 = vsel %vm722, %v549, inf
      %v824 = vsel %vm723, %v552, inf
      %v825 = vsel %vm724, %v557, inf
      %v826 = vsel %vm725, %v560, inf
      %v827 = vmin.f32 %v795, %v799
      %v828 = vmin.f32 %v796, %v800
      %v829 = vmin.f32 %v797, %v801
      %v830 = vmin.f32 %v798, %v802
      %v831 = vmin.f32 %v827, %v803
      %v832 = vmin.f32 %v828, %v804
      %v833 = vmin.f32 %v829, %v805
      %v834 = vmin.f32 %v830, %v806
      %v835 = vmin.f32 %v831, %v807
      %v836 = vmin.f32 %v832, %v808
      %v837 = vmin.f32 %v833, %v809
      %v838 = vmin.f32 %v834, %v810
      %v839 = vmin.f32 %v835, %v811
      %v840 = vmin.f32 %v836, %v812
      %v841 = vmin.f32 %v837, %v813
      %v842 = vmin.f32 %v838, %v814
      %v843 = vmin.f32 %v839, %v815
      %v844 = vmin.f32 %v840, %v816
      %v845 = vmin.f32 %v841, %v817
      %v846 = vmin.f32 %v842, %v818
      %v847 = vmin.f32 %v843, %v819
      %v848 = vmin.f32 %v844, %v820
      %v849 = vmin.f32 %v845, %v821
      %v850 = vmin.f32 %v846, %v822
      %v851 = vmin.f32 %v847, %v823
      %v852 = vmin.f32 %v848, %v824
      %v853 = vmin.f32 %v849, %v825
      %v854 = vmin.f32 %v850, %v826
      %v855 = vmin.f32 %v851, %v852
      %v856 = vmin.f32 %v853, %v854
      %v857 = vmin.f32 %v855, %v856
      %v858 = vrot.slane %v857, 4
      %v859 = vmin.f32 %v857, %v858
      %v860 = vrot.slane %v859, 2
      %v861 = vmin.f32 %v859, %v860
      %v862 = vrot.slane %v861, 1
      %v863 = vmin.f32 %v861, %v862
      %864 = vst [vmem:[%s204] sm:$0xff] %v794
      %865 = vst [vmem:[%s208] sm:$0xff] %v863
      %p866 = scmp.lt.s32.totalorder %s16, 1
      %s867 = scalar_select %p866, %s16, 1
      %s868 = smul.addr %s867, 8
      %s869 = scalar_lea.vmem %s3, %s868
      %p870 = scmp.lt.s32.totalorder %s16, 1
      %s871 = scalar_select %p870, %s16, 1
      %s872 = smul.addr %s871, 8
      %s873 = scalar_lea.vmem %s4, %s872
      // Predicated region
      $region33: #{_fix_conv2d_forward.2} parent=31 // pred_check
        %p874 = pneg %p102
      $region34: #{_fix_conv2d_forward.2} parent=31 // pred_check_branch
        %876 = sbr.rel (%p874) target = $region36
      $region35: #{_fix_conv2d_forward.2} parent=31 // pred_region
        _
      $region36: #{_fix_conv2d_forward.2} parent=31 // pred_fallthru
        _
      // Predicated region
      $region37: #{_fix_conv2d_forward.2} parent=31 // pred_check
        %p877 = pneg %p128
      $region38: #{_fix_conv2d_forward.2} parent=31 // pred_check_branch
        %879 = sbr.rel (%p877) target = $region40
      $region39: #{_fix_conv2d_forward.2} parent=31 // pred_region
        _
      $region40: #{_fix_conv2d_forward.2} parent=31 // pred_fallthru
        _
    $region32: #{_fix_conv2d_forward.2} parent=5 // pred_fallthru
      _
    %p880 = scmp.le.s32.totalorder 2, %s11
    // Predicated region
    $region41: #{_fix_conv2d_forward.2} parent=5 // pred_check
      %p881 = pneg %p880
    $region42: #{_fix_conv2d_forward.2} parent=5 // pred_check_branch
      %883 = sbr.rel (%p881) target = $region44
    $region43: #{_fix_conv2d_forward.2} parent=5 // pred_region
      %s884 = ssub.s32 %s11, 2
      // Predicated region
      $region45: #{_fix_conv2d_forward.2} parent=43 // pred_check
        %p885 = pneg %p108
      $region46: #{_fix_conv2d_forward.2} parent=43 // pred_check_branch
        %887 = sbr.rel (%p885) target = $region48
      $region47: #{_fix_conv2d_forward.2} parent=43 // pred_region
        %p888 = scmp.lt.s32.totalorder %s17, 1
        %s889 = scalar_select %p888, %s17, 1
        %s890 = smul.addr %s889, 8
        %s891 = scalar_lea.vmem %s3, %s890
      $region48: #{_fix_conv2d_forward.2} parent=43 // pred_fallthru
        _
      // Predicated region
      $region49: #{_fix_conv2d_forward.2} parent=43 // pred_check
        %p892 = pneg %p134
      $region50: #{_fix_conv2d_forward.2} parent=43 // pred_check_branch
        %894 = sbr.rel (%p892) target = $region52
      $region51: #{_fix_conv2d_forward.2} parent=43 // pred_region
        %p895 = scmp.lt.s32.totalorder %s17, 1
        %s896 = scalar_select %p895, %s17, 1
        %s897 = smul.addr %s896, 8
        %s898 = scalar_lea.vmem %s4, %s897
      $region52: #{_fix_conv2d_forward.2} parent=43 // pred_fallthru
        _
    $region44: #{_fix_conv2d_forward.2} parent=5 // pred_fallthru
      _
  $region6: #{_fix_conv2d_forward.2} parent=0 // loop_footer
    %s15 = sadd.s32 1, %s11
  $region7: #{_fix_conv2d_forward.2} parent=0 // loop_footer_branch
    %10 = sbr.rel target = $region3
  $region8: #{_fix_conv2d_forward.2} parent=0 // loop_exit
    _

// kernel: _fix_conv2d_forward.3
$region0: #{_fix_conv2d_forward.3}
  #allocation0 [shape = 'u32[]', space=smem, size = 0x4, offset = 0x4, fixed_abs, tag = 'smem constant byte address 0x4 - core index']
  #allocation1 [shape = 'u32[144,128]{1,0:T(1,128)}', space=vmem, size = 0x12000, scoped, tag = 'internal scratch']
  %s0 = inlined_call_operand.vmem [shape: bf16[512,36], index: 0, kind: input, shape index: {}]
  %s1 = inlined_call_operand.vmem [shape: bf16[36,128], index: 1, kind: input, shape index: {}]
  %s2 = inlined_call_operand.vmem [shape: f32[8,128], index: 2, kind: input, shape index: {}]
  %s3 = inlined_call_operand.hbm [shape: f32[512,128], index: 3, kind: output, shape index: {}]
  %s4 = sld [smem:[#allocation0]]
  $region45: #{_fix_conv2d_forward.3} parent=0
    _
  %s6 = ssub.s32 1, %s4
  %s7 = scalar_select 0, %s6, %s4
  $region1: #{_fix_conv2d_forward.3} parent=0
    #allocation2 [shape = 'u8[262144]{0}', space=vmem, size = 0x40000, scoped, tag = 'output window, operand 0']
    #allocation3 [shape = 's32[2]{0}', space=sflag, size = 0x8, scoped, tag = 'scoped memory for _fix_conv2d_forward.3']
    %8 = vsyncpa [#allocation3], 0
    %s9 = scalar_lea.sflag [#allocation3], 1
    %10 = vsyncpa %s9, 0
    loop: start=0, step=1, limit=4
    $region2: #{_fix_conv2d_forward.3} parent=1 // loop_pre_header
      _
    $region3: #{_fix_conv2d_forward.3} parent=1 // loop_header
      %s12 = sphi 0, %s16
      %p13 = scmp.ge.s32.totalorder %s12, 4
      %s22 = sphi 0, %s24
      %s25 = sphi 0, %s22
      %s26 = sphi 0, %s25
      %s42 = sphi 0, %s26
      %s46 = sphi 0, %s46
      %s48 = sphi 0, %s46
      %s49 = sphi 0, %s48
      %s63 = sphi 0, %s49
      %s67 = sphi 0, %s67
      %s69 = sphi 0, %s67
      %s70 = sphi 0, %s69
      %s84 = sphi 0, %s70
      %s90 = sphi 0, %s92
      %s93 = sphi 0, %s90
      %s94 = sphi 0, %s93
      %s110 = sphi 0, %s94
    $region4: #{_fix_conv2d_forward.3} parent=1 // loop_header_branch
      %15 = sbr.rel (%p13) target = $region8
    $region5: #{_fix_conv2d_forward.3} parent=1 // loop_body
      %s17 = ssub.s32 %s12, 1
      %s18 = ssub.s32 %s12, 2
      %s19 = sadd.s32 %s12, 1
      %s20 = ssub.s32 %s12, %s19
      %p21 = scmp.eq.s32.totalorder %s20, 0
      %s23 = sadd.s32 %s22, 1
      %s24 = scalar_select %p21, %s22, %s23
      %p27 = pneg %p21
      %p28 = scmp.eq.s32.totalorder %s12, 1
      %p29 = por %p27, %p28
      %p30 = scmp.ne.s32.totalorder %s22, %s25
      %p31 = scmp.eq.s32.totalorder %s12, 0
      %p32 = por %p30, %p31
      %p33 = scmp.ne.s32.totalorder %s22, %s25
      %p34 = scmp.eq.s32.totalorder %s17, 1
      %p35 = por %p33, %p34
      %p36 = scmp.ne.s32.totalorder %s25, %s26
      %p37 = scmp.eq.s32.totalorder %s17, 0
      %p38 = por %p36, %p37
      %p39 = scmp.ne.s32.totalorder %s25, %s26
      %p40 = scmp.eq.s32.totalorder %s18, 1
      %p41 = por %p39, %p40
      %p43 = scmp.ne.s32.totalorder %s26, %s42
      %p44 = scmp.eq.s32.totalorder %s18, 0
      %p45 = por %p43, %p44
      %s47 = sadd.s32 %s46, 1
      %p50 = scmp.eq.s32.totalorder %s12, 1
      %p51 = scmp.ne.s32.totalorder %s46, %s48
      %p52 = scmp.eq.s32.totalorder %s12, 0
      %p53 = por %p51, %p52
      %p54 = scmp.ne.s32.totalorder %s46, %s48
      %p55 = scmp.eq.s32.totalorder %s17, 1
      %p56 = por %p54, %p55
      %p57 = scmp.ne.s32.totalorder %s48, %s49
      %p58 = scmp.eq.s32.totalorder %s17, 0
      %p59 = por %p57, %p58
      %p60 = scmp.ne.s32.totalorder %s48, %s49
      %p61 = scmp.eq.s32.totalorder %s18, 1
      %p62 = por %p60, %p61
      %p64 = scmp.ne.s32.totalorder %s49, %s63
      %p65 = scmp.eq.s32.totalorder %s18, 0
      %p66 = por %p64, %p65
      %s68 = sadd.s32 %s67, 1
      %p71 = scmp.eq.s32.totalorder %s12, 1
      %p72 = scmp.ne.s32.totalorder %s67, %s69
      %p73 = scmp.eq.s32.totalorder %s12, 0
      %p74 = por %p72, %p73
      %p75 = scmp.ne.s32.totalorder %s67, %s69
      %p76 = scmp.eq.s32.totalorder %s17, 1
      %p77 = por %p75, %p76
      %p78 = scmp.ne.s32.totalorder %s69, %s70
      %p79 = scmp.eq.s32.totalorder %s17, 0
      %p80 = por %p78, %p79
      %p81 = scmp.ne.s32.totalorder %s69, %s70
      %p82 = scmp.eq.s32.totalorder %s18, 1
      %p83 = por %p81, %p82
      %p85 = scmp.ne.s32.totalorder %s70, %s84
      %p86 = scmp.eq.s32.totalorder %s18, 0
      %p87 = por %p85, %p86
      %s88 = ssub.s32 %s12, %s19
      %p89 = scmp.eq.s32.totalorder %s88, 0
      %s91 = sadd.s32 %s90, 1
      %s92 = scalar_select %p89, %s90, %s91
      %p95 = pneg %p89
      %p96 = scmp.eq.s32.totalorder %s12, 1
      %p97 = por %p95, %p96
      %p98 = scmp.ne.s32.totalorder %s90, %s93
      %p99 = scmp.eq.s32.totalorder %s12, 0
      %p100 = por %p98, %p99
      %p101 = scmp.ne.s32.totalorder %s90, %s93
      %p102 = scmp.eq.s32.totalorder %s17, 1
      %p103 = por %p101, %p102
      %p104 = scmp.ne.s32.totalorder %s93, %s94
      %p105 = scmp.eq.s32.totalorder %s17, 0
      %p106 = por %p104, %p105
      %p107 = scmp.ne.s32.totalorder %s93, %s94
      %p108 = scmp.eq.s32.totalorder %s18, 1
      %p109 = por %p107, %p108
      %p111 = scmp.ne.s32.totalorder %s94, %s110
      %p112 = scmp.eq.s32.totalorder %s18, 0
      %p113 = por %p111, %p112
      %p114 = scmp.le.s32.totalorder 1, %s12
      %p115 = scmp.lt.s32.totalorder %s12, 3
      %p116 = pnand %p114, %p115
      %p117 = pneg %p116
      // Predicated region
      $region9: #{_fix_conv2d_forward.3} parent=5 // pred_check
        _
      $region10: #{_fix_conv2d_forward.3} parent=5 // pred_check_branch
        %119 = sbr.rel (%p116) target = $region12
      $region11: #{_fix_conv2d_forward.3} parent=5 // pred_region
        %s120 = ssub.s32 %s12, 1
        // Predicated region
        $region13: #{_fix_conv2d_forward.3} parent=11 // pred_check
          %p121 = pneg %p59
        $region14: #{_fix_conv2d_forward.3} parent=11 // pred_check_branch
          %123 = sbr.rel (%p121) target = $region16
        $region15: #{_fix_conv2d_forward.3} parent=11 // pred_region
          _
        $region16: #{_fix_conv2d_forward.3} parent=11 // pred_fallthru
          _
        // Predicated region
        $region17: #{_fix_conv2d_forward.3} parent=11 // pred_check
          %p124 = pneg %p80
        $region18: #{_fix_conv2d_forward.3} parent=11 // pred_check_branch
          %126 = sbr.rel (%p124) target = $region20
        $region19: #{_fix_conv2d_forward.3} parent=11 // pred_region
          _
        $region20: #{_fix_conv2d_forward.3} parent=11 // pred_fallthru
          _
      $region12: #{_fix_conv2d_forward.3} parent=5 // pred_fallthru
        _
      %p127 = scmp.lt.s32.totalorder %s12, 2
      // Predicated region
      $region21: #{_fix_conv2d_forward.3} parent=5 // pred_check
        %p128 = pneg %p127
      $region22: #{_fix_conv2d_forward.3} parent=5 // pred_check_branch
        %130 = sbr.rel (%p128) target = $region24
      $region23: #{_fix_conv2d_forward.3} parent=5 // pred_region
        // Predicated region
        $region25: #{_fix_conv2d_forward.3} parent=23 // pred_check
          %p131 = pneg %p32
        $region26: #{_fix_conv2d_forward.3} parent=23 // pred_check_branch
          %133 = sbr.rel (%p131) target = $region28
        $region27: #{_fix_conv2d_forward.3} parent=23 // pred_region
          %s134 = smul.u32 32, %s12
          %p135 = scmp.lt.s32.totalorder %s134, 63
          %s136 = scalar_select %p135, %s134, 63
          %s137 = smul.addr %s136, 4
          %s138 = scalar_lea.vmem %s0, %s137
          %s139 = smul.u32 32, %s12
        $region28: #{_fix_conv2d_forward.3} parent=23 // pred_fallthru
          _
      $region24: #{_fix_conv2d_forward.3} parent=5 // pred_fallthru
        _
      %p140 = scmp.le.s32.totalorder 1, %s12
      %p141 = scmp.lt.s32.totalorder %s12, 3
      %p142 = pnand %p140, %p141
      %p143 = pneg %p142
      // Predicated region
      $region29: #{_fix_conv2d_forward.3} parent=5 // pred_check
        _
      $region30: #{_fix_conv2d_forward.3} parent=5 // pred_check_branch
        %145 = sbr.rel (%p142) target = $region32
      $region31: #{_fix_conv2d_forward.3} parent=5 // pred_region
        %s146 = ssub.s32 %s12, 1
        %s147 = smul.u32 32, %s17
        %p148 = scmp.lt.s32.totalorder %s147, 63
        %s149 = scalar_select %p148, %s147, 63
        %s150 = smul.addr %s149, 4
        %s151 = scalar_lea.vmem %s0, %s150
        %p152 = pneg %p38
        %p153 = pneg %p35
        %p154 = pneg %p59
        %p155 = pneg %p56
        %p156 = pneg %p80
        %p157 = pneg %p77
        %p158 = pneg %p106
        %p159 = pneg %p103
        %s160 = sand.u32 %s93, 1
        %s161 = scalar_lea.sflag [#allocation3], %s160
        %s162 = sand.u32 %s93, 1
        %s163 = smul.addr %s162, 256
        %s164 = scalar_lea.vmem [#allocation2], %s163
        %s165 = smul.u32 32, %s17
        %p166 = scmp.lt.s32.totalorder %s165, 63
        %s167 = scalar_select %p166, %s165, 63
        %s168 = smul.addr %s167, 4
        %s169 = scalar_lea.vmem %s0, %s168
        %s170 = smul.u32 32, %s17
        %s171 = smul.u32 32, %s17
        %v173 = vld [vmem:[%s169] sm:$0xf]
        %v174 = vld [vmem:[%s169 + $0x4] sm:$0xf]
        %v175 = vld [vmem:[%s169 + $0x8] sm:$0xf]
        %v176 = vld [vmem:[%s169 + $0xc] sm:$0xf]
        %v177 = vld [vmem:[%s169 + $0x10] sm:$0xf]
        %v178 = vld [vmem:[%s169 + $0x14] sm:$0xf]
        %v179 = vld [vmem:[%s169 + $0x18] sm:$0xf]
        %v180 = vld [vmem:[%s169 + $0x1c] sm:$0xf]
        %v181 = vld [vmem:[%s169 + $0x20] sm:$0xf]
        %v182 = vld [vmem:[%s169 + $0x24] sm:$0xf]
        %v183 = vld [vmem:[%s169 + $0x28] sm:$0xf]
        %v184 = vld [vmem:[%s169 + $0x2c] sm:$0xf]
        %v185 = vld [vmem:[%s169 + $0x30] sm:$0xf]
        %v186 = vld [vmem:[%s169 + $0x34] sm:$0xf]
        %v187 = vld [vmem:[%s169 + $0x38] sm:$0xf]
        %v188 = vld [vmem:[%s169 + $0x3c] sm:$0xf]
        %v189 = vld [vmem:[%s169 + $0x40] sm:$0xf]
        %v190 = vld [vmem:[%s169 + $0x44] sm:$0xf]
        %v191 = vld [vmem:[%s169 + $0x48] sm:$0xf]
        %v192 = vld [vmem:[%s169 + $0x4c] sm:$0xf]
        %v193 = vld [vmem:[%s169 + $0x50] sm:$0xf]
        %v194 = vld [vmem:[%s169 + $0x54] sm:$0xf]
        %v195 = vld [vmem:[%s169 + $0x58] sm:$0xf]
        %v196 = vld [vmem:[%s169 + $0x5c] sm:$0xf]
        %v197 = vld [vmem:[%s169 + $0x60] sm:$0xf]
        %v198 = vld [vmem:[%s169 + $0x64] sm:$0xf]
        %v199 = vld [vmem:[%s169 + $0x68] sm:$0xf]
        %v200 = vld [vmem:[%s169 + $0x6c] sm:$0xf]
        %v201 = vld [vmem:[%s169 + $0x70] sm:$0xf]
        %v202 = vld [vmem:[%s169 + $0x74] sm:$0xf]
        %v203 = vld [vmem:[%s169 + $0x78] sm:$0xf]
        %v204 = vld [vmem:[%s169 + $0x7c] sm:$0xf]
        %v205 = vld [vmem:[%s1] sm:$0xf]
        %v206 = vld [vmem:[%s1 + $0x4] sm:$0xf]
        %v207 = vld [vmem:[%s1 + $0x8] sm:$0xf]
        %v208 = vld [vmem:[%s1 + $0xc] sm:$0xf]
        %v209 = vld [vmem:[%s1 + $0x10] sm:$0x3]
        %v210 = vld [vmem:[%s2] sm:$0x1]
        %v211 = vld [vmem:[%s2 + $0x1] sm:$0x1]
        %v212 = vld [vmem:[%s2 + $0x2] sm:$0x1]
        %v213 = vld [vmem:[%s2 + $0x3] sm:$0x1]
        %v214 = vld [vmem:[%s2 + $0x4] sm:$0x1]
        %v215 = vlaneseq
        %v216 = vshrl.u32 %v215, 7
        %v217 = vsub.s32 0, %v216
        %v218 = vrot.slane %v210, %v217
        %v251 = vunpack.c.l.b16 %v173
        %v252 = vunpack.c.l.b16 %v174
        %v253 = vunpack.c.l.b16 %v175
        %v254 = vunpack.c.l.b16 %v176
        %v255 = vunpack.c.l.b16 %v177
        %v256 = vunpack.c.l.b16 %v178
        %v257 = vunpack.c.l.b16 %v179
        %v258 = vunpack.c.l.b16 %v180
        %v259 = vunpack.c.l.b16 %v181
        %v260 = vunpack.c.l.b16 %v182
        %v261 = vunpack.c.l.b16 %v183
        %v262 = vunpack.c.l.b16 %v184
        %v263 = vunpack.c.l.b16 %v185
        %v264 = vunpack.c.l.b16 %v186
        %v265 = vunpack.c.l.b16 %v187
        %v266 = vunpack.c.l.b16 %v188
        %v267 = vunpack.c.l.b16 %v189
        %v268 = vunpack.c.l.b16 %v190
        %v269 = vunpack.c.l.b16 %v191
        %v270 = vunpack.c.l.b16 %v192
        %v271 = vunpack.c.l.b16 %v193
        %v272 = vunpack.c.l.b16 %v194
        %v273 = vunpack.c.l.b16 %v195
        %v274 = vunpack.c.l.b16 %v196
        %v275 = vunpack.c.l.b16 %v197
        %v276 = vunpack.c.l.b16 %v198
        %v277 = vunpack.c.l.b16 %v199
        %v278 = vunpack.c.l.b16 %v200
        %v279 = vunpack.c.l.b16 %v201
        %v280 = vunpack.c.l.b16 %v202
        %v281 = vunpack.c.l.b16 %v203
        %v282 = vunpack.c.l.b16 %v204
        %v283 = vpack.c.b16 %v252, %v251
        %v284 = vpack.c.b16 %v254, %v253
        %v285 = vpack.c.b16 %v256, %v255
        %v286 = vpack.c.b16 %v258, %v257
        %v287 = vpack.c.b16 %v260, %v259
        %v288 = vpack.c.b16 %v262, %v261
        %v289 = vpack.c.b16 %v264, %v263
        %v290 = vpack.c.b16 %v266, %v265
        %v291 = vpack.c.b16 %v268, %v267
        %v292 = vpack.c.b16 %v270, %v269
        %v293 = vpack.c.b16 %v272, %v271
        %v294 = vpack.c.b16 %v274, %v273
        %v295 = vpack.c.b16 %v276, %v275
        %v296 = vpack.c.b16 %v278, %v277
        %v297 = vpack.c.b16 %v280, %v279
        %v298 = vpack.c.b16 %v282, %v281
        %v304 = vunpack.c.l.b16 %v205
        %v305 = vunpack.c.l.b16 %v206
        %v306 = vunpack.c.l.b16 %v207
        %v307 = vunpack.c.l.b16 %v208
        %v308 = vunpack.c.l.b16 %v209
        %v309 = vpack.c.b16 %v305, %v304
        %v310 = vpack.c.b16 %v307, %v306
        %v311 = vpack.c.b16 %v308, %v308
        %vm314 = vcmask 293888
        %v316 = vsel %vm314, %v283, 0
        %v319 = vsel %vm314, %v284, 0
        %v322 = vsel %vm314, %v285, 0
        %v325 = vsel %vm314, %v286, 0
        %v328 = vsel %vm314, %v287, 0
        %v331 = vsel %vm314, %v288, 0
        %v334 = vsel %vm314, %v289, 0
        %v337 = vsel %vm314, %v290, 0
        %v340 = vsel %vm314, %v291, 0
        %v343 = vsel %vm314, %v292, 0
        %v346 = vsel %vm314, %v293, 0
        %v349 = vsel %vm314, %v294, 0
        %v352 = vsel %vm314, %v295, 0
        %v355 = vsel %vm314, %v296, 0
        %v358 = vsel %vm314, %v297, 0
        %v361 = vsel %vm314, %v298, 0
        %vm363 = vcmask 1041408
        %v365 = vsel %vm363, %v311, 0
        %367 = vmatprep.subr.bf16.mxu0 0
        %368 = vmatpush1.bf16.msra.mxu0 %v309
        %369 = vmatprep.subr.bf16.mxu0 0
        %370 = vmatpush1.bf16.msra.mxu0 %v310
        %371 = vmatprep.subr.bf16.mxu0 0
        %372 = vmatpush1.bf16.msra.mxu0 %v365
        %373 = vmatprep.subr.bf16.mxu0 0
        %374 = vmatpush1.bf16.msra.mxu0 0
        %375 = vmatprep.subr.bf16.mxu0 0
        %376 = vmatpush1.bf16.msra.mxu0 0
        %377 = vmatprep.subr.bf16.mxu0 0
        %378 = vmatpush1.bf16.msra.mxu0 0
        %379 = vmatprep.subr.bf16.mxu0 0
        %380 = vmatpush1.bf16.msra.mxu0 0
        %381 = vmatprep.subr.bf16.mxu0 0
        %382 = vmatpush1.bf16.msra.mxu0 0
        %383 = vmatprep.subr.bf16.mxu0 0
        %384 = vmatpush1.bf16.msra.mxu0 0
        %385 = vmatprep.subr.bf16.mxu0 0
        %386 = vmatpush1.bf16.msra.mxu0 0
        %387 = vmatprep.subr.bf16.mxu0 0
        %388 = vmatpush1.bf16.msra.mxu0 0
        %389 = vmatprep.subr.bf16.mxu0 0
        %390 = vmatpush1.bf16.msra.mxu0 0
        %391 = vmatprep.subr.bf16.mxu0 0
        %392 = vmatpush1.bf16.msra.mxu0 0
        %393 = vmatprep.subr.bf16.mxu0 0
        %394 = vmatpush1.bf16.msra.mxu0 0
        %395 = vmatprep.subr.bf16.mxu0 0
        %396 = vmatpush1.bf16.msra.mxu0 0
        %397 = vmatprep.subr.bf16.mxu0 0
        %398 = vmatpush1.bf16.msra.mxu0 0
        %399 = vmatprep.mubr.bf16.mxu0 0
        %400 = vmatmul.mubr.bf16.gmra.mrb[0].mxu0 %v316
        %v401 = vpop.f32.mrb[0].mxu0
        %v402 = vadd.f32 %v218, %v401
        %v403 = vpop.f32.mrb[0].mxu0
        %v404 = vpop.f32.mrb[0].mxu0
        %v405 = vadd.f32 %v218, %v404
        %v406 = vpop.f32.mrb[0].mxu0
        %407 = vmatprep.mubr.bf16.mxu0 0
        %408 = vmatmul.mubr.bf16.gmra.mrb[0].mxu0 %v319
        %v409 = vpop.f32.mrb[0].mxu0
        %v410 = vadd.f32 %v218, %v409
        %v411 = vpop.f32.mrb[0].mxu0
        %v412 = vpop.f32.mrb[0].mxu0
        %v413 = vadd.f32 %v218, %v412
        %v414 = vpop.f32.mrb[0].mxu0
        %415 = vmatprep.mubr.bf16.mxu0 0
        %416 = vmatmul.mubr.bf16.gmra.mrb[0].mxu0 %v322
        %v417 = vpop.f32.mrb[0].mxu0
        %v418 = vadd.f32 %v218, %v417
        %v419 = vpop.f32.mrb[0].mxu0
        %v420 = vpop.f32.mrb[0].mxu0
        %v421 = vadd.f32 %v218, %v420
        %v422 = vpop.f32.mrb[0].mxu0
        %423 = vmatprep.mubr.bf16.mxu0 0
        %424 = vmatmul.mubr.bf16.gmra.mrb[0].mxu0 %v325
        %v425 = vpop.f32.mrb[0].mxu0
        %v426 = vadd.f32 %v218, %v425
        %v427 = vpop.f32.mrb[0].mxu0
        %v428 = vpop.f32.mrb[0].mxu0
        %v429 = vadd.f32 %v218, %v428
        %v430 = vpop.f32.mrb[0].mxu0
        %431 = vmatprep.mubr.bf16.mxu0 0
        %432 = vmatmul.mubr.bf16.gmra.mrb[0].mxu0 %v328
        %v433 = vpop.f32.mrb[0].mxu0
        %v434 = vadd.f32 %v218, %v433
        %v435 = vpop.f32.mrb[0].mxu0
        %v436 = vpop.f32.mrb[0].mxu0
        %v437 = vadd.f32 %v218, %v436
        %v438 = vpop.f32.mrb[0].mxu0
        %439 = vmatprep.mubr.bf16.mxu0 0
        %440 = vmatmul.mubr.bf16.gmra.mrb[0].mxu0 %v331
        %v441 = vpop.f32.mrb[0].mxu0
        %v442 = vadd.f32 %v218, %v441
        %v443 = vpop.f32.mrb[0].mxu0
        %v444 = vpop.f32.mrb[0].mxu0
        %v445 = vadd.f32 %v218, %v444
        %v446 = vpop.f32.mrb[0].mxu0
        %447 = vmatprep.mubr.bf16.mxu0 0
        %448 = vmatmul.mubr.bf16.gmra.mrb[0].mxu0 %v334
        %v449 = vpop.f32.mrb[0].mxu0
        %v450 = vadd.f32 %v218, %v449
        %v451 = vpop.f32.mrb[0].mxu0
        %v452 = vpop.f32.mrb[0].mxu0
        %v453 = vadd.f32 %v218, %v452
        %v454 = vpop.f32.mrb[0].mxu0
        %455 = vmatprep.mubr.bf16.mxu0 0
        %456 = vmatmul.mubr.bf16.gmra.mrb[0].mxu0 %v337
        %v457 = vpop.f32.mrb[0].mxu0
        %v458 = vadd.f32 %v218, %v457
        %v459 = vpop.f32.mrb[0].mxu0
        %v460 = vpop.f32.mrb[0].mxu0
        %v461 = vadd.f32 %v218, %v460
        %v462 = vpop.f32.mrb[0].mxu0
        %463 = vmatprep.mubr.bf16.mxu0 0
        %464 = vmatmul.mubr.bf16.gmra.mrb[0].mxu0 %v340
        %v465 = vpop.f32.mrb[0].mxu0
        %v466 = vadd.f32 %v218, %v465
        %v467 = vpop.f32.mrb[0].mxu0
        %v468 = vpop.f32.mrb[0].mxu0
        %v469 = vadd.f32 %v218, %v468
        %v470 = vpop.f32.mrb[0].mxu0
        %471 = vmatprep.mubr.bf16.mxu0 0
        %472 = vmatmul.mubr.bf16.gmra.mrb[0].mxu0 %v343
        %v473 = vpop.f32.mrb[0].mxu0
        %v474 = vadd.f32 %v218, %v473
        %v475 = vpop.f32.mrb[0].mxu0
        %v476 = vpop.f32.mrb[0].mxu0
        %v477 = vadd.f32 %v218, %v476
        %v478 = vpop.f32.mrb[0].mxu0
        %479 = vmatprep.mubr.bf16.mxu0 0
        %480 = vmatmul.mubr.bf16.gmra.mrb[0].mxu0 %v346
        %v481 = vpop.f32.mrb[0].mxu0
        %v482 = vadd.f32 %v218, %v481
        %v483 = vpop.f32.mrb[0].mxu0
        %v484 = vpop.f32.mrb[0].mxu0
        %v485 = vadd.f32 %v218, %v484
        %v486 = vpop.f32.mrb[0].mxu0
        %487 = vmatprep.mubr.bf16.mxu0 0
        %488 = vmatmul.mubr.bf16.gmra.mrb[0].mxu0 %v349
        %v489 = vpop.f32.mrb[0].mxu0
        %v490 = vadd.f32 %v218, %v489
        %v491 = vpop.f32.mrb[0].mxu0
        %v492 = vpop.f32.mrb[0].mxu0
        %v493 = vadd.f32 %v218, %v492
        %v494 = vpop.f32.mrb[0].mxu0
        %495 = vmatprep.mubr.bf16.mxu0 0
        %496 = vmatmul.mubr.bf16.gmra.mrb[0].mxu0 %v352
        %v497 = vpop.f32.mrb[0].mxu0
        %v498 = vadd.f32 %v218, %v497
        %v499 = vpop.f32.mrb[0].mxu0
        %v500 = vpop.f32.mrb[0].mxu0
        %v501 = vadd.f32 %v218, %v500
        %v502 = vpop.f32.mrb[0].mxu0
        %503 = vmatprep.mubr.bf16.mxu0 0
        %504 = vmatmul.mubr.bf16.gmra.mrb[0].mxu0 %v355
        %v505 = vpop.f32.mrb[0].mxu0
        %v506 = vadd.f32 %v218, %v505
        %v507 = vpop.f32.mrb[0].mxu0
        %v508 = vpop.f32.mrb[0].mxu0
        %v509 = vadd.f32 %v218, %v508
        %v510 = vpop.f32.mrb[0].mxu0
        %511 = vmatprep.mubr.bf16.mxu0 0
        %512 = vmatmul.mubr.bf16.gmra.mrb[0].mxu0 %v358
        %v513 = vpop.f32.mrb[0].mxu0
        %v514 = vadd.f32 %v218, %v513
        %v515 = vpop.f32.mrb[0].mxu0
        %v516 = vpop.f32.mrb[0].mxu0
        %v517 = vadd.f32 %v218, %v516
        %v518 = vpop.f32.mrb[0].mxu0
        %519 = vmatprep.mubr.bf16.mxu0 0
        %520 = vmatmul.mubr.bf16.gmra.mrb[0].mxu0 %v361
        %v521 = vpop.f32.mrb[0].mxu0
        %v522 = vadd.f32 %v218, %v521
        %v523 = vpop.f32.mrb[0].mxu0
        %v524 = vpop.f32.mrb[0].mxu0
        %v525 = vadd.f32 %v218, %v524
        %v526 = vpop.f32.mrb[0].mxu0
        %527 = vdwg.mxu0
        %v528 = vlaneseq
        %v529 = vshrl.u32 %v528, 7
        %v530 = vsub.s32 0, %v529
        %v531 = vrot.slane %v211, %v530
        %v532 = vmax.f32 %v531, %v402
        %v533 = vmax.f32 %v531, %v405
        %v534 = vmax.f32 %v531, %v410
        %v535 = vmax.f32 %v531, %v413
        %v536 = vmax.f32 %v531, %v418
        %v537 = vmax.f32 %v531, %v421
        %v538 = vmax.f32 %v531, %v426
        %v539 = vmax.f32 %v531, %v429
        %v540 = vmax.f32 %v531, %v434
        %v541 = vmax.f32 %v531, %v437
        %v542 = vmax.f32 %v531, %v442
        %v543 = vmax.f32 %v531, %v445
        %v544 = vmax.f32 %v531, %v450
        %v545 = vmax.f32 %v531, %v453
        %v546 = vmax.f32 %v531, %v458
        %v547 = vmax.f32 %v531, %v461
        %v548 = vmax.f32 %v531, %v466
        %v549 = vmax.f32 %v531, %v469
        %v550 = vmax.f32 %v531, %v474
        %v551 = vmax.f32 %v531, %v477
        %v552 = vmax.f32 %v531, %v482
        %v553 = vmax.f32 %v531, %v485
        %v554 = vmax.f32 %v531, %v490
        %v555 = vmax.f32 %v531, %v493
        %v556 = vmax.f32 %v531, %v498
        %v557 = vmax.f32 %v531, %v501
        %v558 = vmax.f32 %v531, %v506
        %v559 = vmax.f32 %v531, %v509
        %v560 = vmax.f32 %v531, %v514
        %v561 = vmax.f32 %v531, %v517
        %v562 = vmax.f32 %v531, %v522
        %v563 = vmax.f32 %v531, %v525
        %v564 = vlaneseq
        %v565 = vshrl.u32 %v564, 7
        %v566 = vsub.s32 0, %v565
        %v567 = vrot.slane %v212, %v566
        %v568 = vmin.f32 %v567, %v532
        %v569 = vmin.f32 %v567, %v533
        %v570 = vmin.f32 %v567, %v534
        %v571 = vmin.f32 %v567, %v535
        %v572 = vmin.f32 %v567, %v536
        %v573 = vmin.f32 %v567, %v537
        %v574 = vmin.f32 %v567, %v538
        %v575 = vmin.f32 %v567, %v539
        %v576 = vmin.f32 %v567, %v540
        %v577 = vmin.f32 %v567, %v541
        %v578 = vmin.f32 %v567, %v542
        %v579 = vmin.f32 %v567, %v543
        %v580 = vmin.f32 %v567, %v544
        %v581 = vmin.f32 %v567, %v545
        %v582 = vmin.f32 %v567, %v546
        %v583 = vmin.f32 %v567, %v547
        %v584 = vmin.f32 %v567, %v548
        %v585 = vmin.f32 %v567, %v549
        %v586 = vmin.f32 %v567, %v550
        %v587 = vmin.f32 %v567, %v551
        %v588 = vmin.f32 %v567, %v552
        %v589 = vmin.f32 %v567, %v553
        %v590 = vmin.f32 %v567, %v554
        %v591 = vmin.f32 %v567, %v555
        %v592 = vmin.f32 %v567, %v556
        %v593 = vmin.f32 %v567, %v557
        %v594 = vmin.f32 %v567, %v558
        %v595 = vmin.f32 %v567, %v559
        %v596 = vmin.f32 %v567, %v560
        %v597 = vmin.f32 %v567, %v561
        %v598 = vmin.f32 %v567, %v562
        %v599 = vmin.f32 %v567, %v563
        %v600 = vsub.f32 %v568, %v531
        %v601 = vsub.f32 %v569, %v531
        %v602 = vsub.f32 %v570, %v531
        %v603 = vsub.f32 %v571, %v531
        %v604 = vsub.f32 %v572, %v531
        %v605 = vsub.f32 %v573, %v531
        %v606 = vsub.f32 %v574, %v531
        %v607 = vsub.f32 %v575, %v531
        %v608 = vsub.f32 %v576, %v531
        %v609 = vsub.f32 %v577, %v531
        %v610 = vsub.f32 %v578, %v531
        %v611 = vsub.f32 %v579, %v531
        %v612 = vsub.f32 %v580, %v531
        %v613 = vsub.f32 %v581, %v531
        %v614 = vsub.f32 %v582, %v531
        %v615 = vsub.f32 %v583, %v531
        %v616 = vsub.f32 %v584, %v531
        %v617 = vsub.f32 %v585, %v531
        %v618 = vsub.f32 %v586, %v531
        %v619 = vsub.f32 %v587, %v531
        %v620 = vsub.f32 %v588, %v531
        %v621 = vsub.f32 %v589, %v531
        %v622 = vsub.f32 %v590, %v531
        %v623 = vsub.f32 %v591, %v531
        %v624 = vsub.f32 %v592, %v531
        %v625 = vsub.f32 %v593, %v531
        %v626 = vsub.f32 %v594, %v531
        %v627 = vsub.f32 %v595, %v531
        %v628 = vsub.f32 %v596, %v531
        %v629 = vsub.f32 %v597, %v531
        %v630 = vsub.f32 %v598, %v531
        %v631 = vsub.f32 %v599, %v531
        %v632 = vlaneseq
        %v633 = vshrl.u32 %v632, 7
        %v634 = vsub.s32 0, %v633
        %v635 = vrot.slane %v214, %v634
        %v636 = vmul.f32 %v600, %v635
        %v637 = vmul.f32 %v601, %v635
        %v638 = vmul.f32 %v602, %v635
        %v639 = vmul.f32 %v603, %v635
        %v640 = vmul.f32 %v604, %v635
        %v641 = vmul.f32 %v605, %v635
        %v642 = vmul.f32 %v606, %v635
        %v643 = vmul.f32 %v607, %v635
        %v644 = vmul.f32 %v608, %v635
        %v645 = vmul.f32 %v609, %v635
        %v646 = vmul.f32 %v610, %v635
        %v647 = vmul.f32 %v611, %v635
        %v648 = vmul.f32 %v612, %v635
        %v649 = vmul.f32 %v613, %v635
        %v650 = vmul.f32 %v614, %v635
        %v651 = vmul.f32 %v615, %v635
        %v652 = vmul.f32 %v616, %v635
        %v653 = vmul.f32 %v617, %v635
        %v654 = vmul.f32 %v618, %v635
        %v655 = vmul.f32 %v619, %v635
        %v656 = vmul.f32 %v620, %v635
        %v657 = vmul.f32 %v621, %v635
        %v658 = vmul.f32 %v622, %v635
        %v659 = vmul.f32 %v623, %v635
        %v660 = vmul.f32 %v624, %v635
        %v661 = vmul.f32 %v625, %v635
        %v662 = vmul.f32 %v626, %v635
        %v663 = vmul.f32 %v627, %v635
        %v664 = vmul.f32 %v628, %v635
        %v665 = vmul.f32 %v629, %v635
        %v666 = vmul.f32 %v630, %v635
        %v667 = vmul.f32 %v631, %v635
        %v668 = vround.ne.pseudo %v636
        %v669 = vround.ne.pseudo %v637
        %v670 = vround.ne.pseudo %v638
        %v671 = vround.ne.pseudo %v639
        %v672 = vround.ne.pseudo %v640
        %v673 = vround.ne.pseudo %v641
        %v674 = vround.ne.pseudo %v642
        %v675 = vround.ne.pseudo %v643
        %v676 = vround.ne.pseudo %v644
        %v677 = vround.ne.pseudo %v645
        %v678 = vround.ne.pseudo %v646
        %v679 = vround.ne.pseudo %v647
        %v680 = vround.ne.pseudo %v648
        %v681 = vround.ne.pseudo %v649
        %v682 = vround.ne.pseudo %v650
        %v683 = vround.ne.pseudo %v651
        %v684 = vround.ne.pseudo %v652
        %v685 = vround.ne.pseudo %v653
        %v686 = vround.ne.pseudo %v654
        %v687 = vround.ne.pseudo %v655
        %v688 = vround.ne.pseudo %v656
        %v689 = vround.ne.pseudo %v657
        %v690 = vround.ne.pseudo %v658
        %v691 = vround.ne.pseudo %v659
        %v692 = vround.ne.pseudo %v660
        %v693 = vround.ne.pseudo %v661
        %v694 = vround.ne.pseudo %v662
        %v695 = vround.ne.pseudo %v663
        %v696 = vround.ne.pseudo %v664
        %v697 = vround.ne.pseudo %v665
        %v698 = vround.ne.pseudo %v666
        %v699 = vround.ne.pseudo %v667
        %v700 = vlaneseq
        %v701 = vshrl.u32 %v700, 7
        %v702 = vsub.s32 0, %v701
        %v703 = vrot.slane %v213, %v702
        %v704 = vmul.f32 %v668, %v703
        %v705 = vmul.f32 %v669, %v703
        %v706 = vmul.f32 %v670, %v703
        %v707 = vmul.f32 %v671, %v703
        %v708 = vmul.f32 %v672, %v703
        %v709 = vmul.f32 %v673, %v703
        %v710 = vmul.f32 %v674, %v703
        %v711 = vmul.f32 %v675, %v703
        %v712 = vmul.f32 %v676, %v703
        %v713 = vmul.f32 %v677, %v703
        %v714 = vmul.f32 %v678, %v703
        %v715 = vmul.f32 %v679, %v703
        %v716 = vmul.f32 %v680, %v703
        %v717 = vmul.f32 %v681, %v703
        %v718 = vmul.f32 %v682, %v703
        %v719 = vmul.f32 %v683, %v703
        %v720 = vmul.f32 %v684, %v703
        %v721 = vmul.f32 %v685, %v703
        %v722 = vmul.f32 %v686, %v703
        %v723 = vmul.f32 %v687, %v703
        %v724 = vmul.f32 %v688, %v703
        %v725 = vmul.f32 %v689, %v703
        %v726 = vmul.f32 %v690, %v703
        %v727 = vmul.f32 %v691, %v703
        %v728 = vmul.f32 %v692, %v703
        %v729 = vmul.f32 %v693, %v703
        %v730 = vmul.f32 %v694, %v703
        %v731 = vmul.f32 %v695, %v703
        %v732 = vmul.f32 %v696, %v703
        %v733 = vmul.f32 %v697, %v703
        %v734 = vmul.f32 %v698, %v703
        %v735 = vmul.f32 %v699, %v703
        %v736 = vadd.f32 %v704, %v531
        %v737 = vadd.f32 %v705, %v531
        %v738 = vadd.f32 %v706, %v531
        %v739 = vadd.f32 %v707, %v531
        %v740 = vadd.f32 %v708, %v531
        %v741 = vadd.f32 %v709, %v531
        %v742 = vadd.f32 %v710, %v531
        %v743 = vadd.f32 %v711, %v531
        %v744 = vadd.f32 %v712, %v531
        %v745 = vadd.f32 %v713, %v531
        %v746 = vadd.f32 %v714, %v531
        %v747 = vadd.f32 %v715, %v531
        %v748 = vadd.f32 %v716, %v531
        %v749 = vadd.f32 %v717, %v531
        %v750 = vadd.f32 %v718, %v531
        %v751 = vadd.f32 %v719, %v531
        %v752 = vadd.f32 %v720, %v531
        %v753 = vadd.f32 %v721, %v531
        %v754 = vadd.f32 %v722, %v531
        %v755 = vadd.f32 %v723, %v531
        %v756 = vadd.f32 %v724, %v531
        %v757 = vadd.f32 %v725, %v531
        %v758 = vadd.f32 %v726, %v531
        %v759 = vadd.f32 %v727, %v531
        %v760 = vadd.f32 %v728, %v531
        %v761 = vadd.f32 %v729, %v531
        %v762 = vadd.f32 %v730, %v531
        %v763 = vadd.f32 %v731, %v531
        %v764 = vadd.f32 %v732, %v531
        %v765 = vadd.f32 %v733, %v531
        %v766 = vadd.f32 %v734, %v531
        %v767 = vadd.f32 %v735, %v531
        %768 = vst [vmem:[%s164] sm:$0xff] %v736
        %769 = vst [vmem:[%s164 + $0x8] sm:$0xff] %v737
        %770 = vst [vmem:[%s164 + $0x10] sm:$0xff] %v738
        %771 = vst [vmem:[%s164 + $0x18] sm:$0xff] %v739
        %772 = vst [vmem:[%s164 + $0x20] sm:$0xff] %v740
        %773 = vst [vmem:[%s164 + $0x28] sm:$0xff] %v741
        %774 = vst [vmem:[%s164 + $0x30] sm:$0xff] %v742
        %775 = vst [vmem:[%s164 + $0x38] sm:$0xff] %v743
        %776 = vst [vmem:[%s164 + $0x40] sm:$0xff] %v744
        %777 = vst [vmem:[%s164 + $0x48] sm:$0xff] %v745
        %778 = vst [vmem:[%s164 + $0x50] sm:$0xff] %v746
        %779 = vst [vmem:[%s164 + $0x58] sm:$0xff] %v747
        %780 = vst [vmem:[%s164 + $0x60] sm:$0xff] %v748
        %781 = vst [vmem:[%s164 + $0x68] sm:$0xff] %v749
        %782 = vst [vmem:[%s164 + $0x70] sm:$0xff] %v750
        %783 = vst [vmem:[%s164 + $0x78] sm:$0xff] %v751
        %784 = vst [vmem:[%s164 + $0x80] sm:$0xff] %v752
        %785 = vst [vmem:[%s164 + $0x88] sm:$0xff] %v753
        %786 = vst [vmem:[%s164 + $0x90] sm:$0xff] %v754
        %787 = vst [vmem:[%s164 + $0x98] sm:$0xff] %v755
        %788 = vst [vmem:[%s164 + $0xa0] sm:$0xff] %v756
        %789 = vst [vmem:[%s164 + $0xa8] sm:$0xff] %v757
        %790 = vst [vmem:[%s164 + $0xb0] sm:$0xff] %v758
        %791 = vst [vmem:[%s164 + $0xb8] sm:$0xff] %v759
        %792 = vst [vmem:[%s164 + $0xc0] sm:$0xff] %v760
        %793 = vst [vmem:[%s164 + $0xc8] sm:$0xff] %v761
        %794 = vst [vmem:[%s164 + $0xd0] sm:$0xff] %v762
        %795 = vst [vmem:[%s164 + $0xd8] sm:$0xff] %v763
        %796 = vst [vmem:[%s164 + $0xe0] sm:$0xff] %v764
        %797 = vst [vmem:[%s164 + $0xe8] sm:$0xff] %v765
        %798 = vst [vmem:[%s164 + $0xf0] sm:$0xff] %v766
        %799 = vst [vmem:[%s164 + $0xf8] sm:$0xff] %v767
        %s800 = sand.u32 %s93, 1
        %s801 = scalar_lea.sflag [#allocation3], %s800
        %s802 = sand.u32 %s93, 1
        %s803 = smul.addr %s802, 256
        %s804 = scalar_lea.vmem [#allocation2], %s803
        // Predicated region
        $region33: #{_fix_conv2d_forward.3} parent=31 // pred_check
          %p805 = pneg %p103
        $region34: #{_fix_conv2d_forward.3} parent=31 // pred_check_branch
          %807 = sbr.rel (%p805) target = $region36
        $region35: #{_fix_conv2d_forward.3} parent=31 // pred_region
          %s808 = smul.u32 32, %s17
          %s810 = ssub.s32 4096, 4096
          %811 = vsyncadd %s801, %s810
          %s812 = smul.addr %s808, 128
          %s813 = scalar_lea.hbm %s3, %s812
          %s814 = sshll.u32 %s804, 4
          %s815 = int_to_ptr.vmem [resolvable:$true] %s814
          %820 = dma.vmem_to_hbm [thread:$0]  %s815, 4096, %s813, %s801, 128, 128, 8
        $region36: #{_fix_conv2d_forward.3} parent=31 // pred_fallthru
          _
      $region32: #{_fix_conv2d_forward.3} parent=5 // pred_fallthru
        _
      %p821 = scmp.le.s32.totalorder 2, %s12
      // Predicated region
      $region37: #{_fix_conv2d_forward.3} parent=5 // pred_check
        %p822 = pneg %p821
      $region38: #{_fix_conv2d_forward.3} parent=5 // pred_check_branch
        %824 = sbr.rel (%p822) target = $region40
      $region39: #{_fix_conv2d_forward.3} parent=5 // pred_region
        %s825 = ssub.s32 %s12, 2
        // Predicated region
        $region41: #{_fix_conv2d_forward.3} parent=39 // pred_check
          %p826 = pneg %p109
        $region42: #{_fix_conv2d_forward.3} parent=39 // pred_check_branch
          %828 = sbr.rel (%p826) target = $region44
        $region43: #{_fix_conv2d_forward.3} parent=39 // pred_region
          %s829 = sand.u32 %s94, 1
          %s830 = scalar_lea.sflag [#allocation3], %s829
          %s831 = sand.u32 %s94, 1
          %s832 = smul.addr %s831, 256
          %s833 = scalar_lea.vmem [#allocation2], %s832
          %834 = dma.done %s830, 4096
        $region44: #{_fix_conv2d_forward.3} parent=39 // pred_fallthru
          _
      $region40: #{_fix_conv2d_forward.3} parent=5 // pred_fallthru
        _
    $region6: #{_fix_conv2d_forward.3} parent=1 // loop_footer
      %s16 = sadd.s32 1, %s12
    $region7: #{_fix_conv2d_forward.3} parent=1 // loop_footer_branch
      %11 = sbr.rel target = $region3
    $region8: #{_fix_conv2d_forward.3} parent=1 // loop_exit
      _
    %835 = vsyncpa [#allocation3], 1
    %s836 = scalar_lea.sflag [#allocation3], 1
    %837 = vsyncpa %s836, 1

</llo_original>
